<compile_context>
chip_gen: v7x
topology: tpu7x:2x2x1
jax: 0.10.0
libtpu: 0.0.40
codegen_flags: <defaults>
</compile_context>

<pallas_src>
import jax
import jax.numpy as jnp
import numpy as np
from jax import lax
from jax.experimental import pallas as pl
from jax.experimental.pallas import tpu as pltpu


def acs_kernel_split(out_channels: int):
    base, r = out_channels // 3, out_channels % 3
    if r == 0:
        return (base, base, base)
    if r == 1:
        return (base + 1, base, base)
    return (base + 1, base + 1, base)


def _pick_hw_tile(hw, max_lanes=2048):
    """Largest multiple-of-128 divisor of hw that is <= max_lanes (else hw itself)."""
    if hw % 128 != 0:
        return hw
    best, t = 128, 128
    while t <= min(hw, max_lanes):
        if hw % t == 0:
            best = t
        t += 128
    return best


def _make_kernel(nc_pad, hw_tile, D, K):
    def kernel(w_ref, b_ref, x_ref, o_ref):
        # w_ref: VMEM bf16[K, nc_pad, C_in*K*K]        per-depth-tap weight matrices
        # b_ref: VMEM f32 [nc_pad, 1]                  bias (padded classes -> 0)
        # x_ref: VMEM bf16[1, D+2p, C_in*K*K, hw_tile] pre-shifted taps, H*W on lanes
        # o_ref: VMEM f32 [1, nc_pad, hw_tile]
        def body(d, acc):
            # conv result at output depth d: MXU matmuls over the C_in*K*K taps,
            # one per depth tap kd (small static unrolled loop).
            y = jnp.dot(w_ref[0], x_ref[0, d], preferred_element_type=jnp.float32)
            for kd in range(1, K):
                y = y + jnp.dot(w_ref[kd], x_ref[0, d + kd],
                                preferred_element_type=jnp.float32)
            return jnp.maximum(acc, y)          # running max over depth

        acc0 = jnp.full((nc_pad, hw_tile), -jnp.inf, jnp.float32)
        acc = lax.fori_loop(0, D, body, acc0, unroll=(D <= 16))
        # per-channel bias commutes with the max; single lane-dense (8, hw_tile) store
        o_ref[0] = acc + b_ref[...]

    return kernel


def segmentation_head_acs(x, weight2d, bias, kernel_size=3):
    """x: (B, C_in, D, H, W) f32.  weight2d: (n_classes, C_in, k, k).  bias: (n_classes,)."""
    B, C_in, D, H, W = x.shape
    n_classes = weight2d.shape[0]
    K = kernel_size
    p = K // 2
    dpad = D + 2 * p
    HW = H * W
    ckk = C_in * K * K
    nc_pad = ((n_classes + 7) // 8) * 8
    hw_tile = _pick_hw_tile(HW)

    split = acs_kernel_split(n_classes)
    group_of = tuple(0 if co < split[0] else (1 if co < split[0] + split[1] else 2)
                     for co in range(n_classes))

    # ---- wrapper-side relayout (plain XLA ops) -------------------------------------
    # TODO(synk): for production C_in/H/W, build the K*K spatial taps in-kernel from a
    # lane-dense padded slab (pltpu.roll + edge masks) and tile C_in/D, instead of this
    # K*K x HBM inflation; small shapes here make the pre-shift the simpler, safe choice.
    x_pad = jnp.pad(x, ((0, 0), (0, 0), (p, p), (p, p), (p, p)))
    slabs = [x_pad[:, :, :, kh:kh + H, kw:kw + W]
             for kh in range(K) for kw in range(K)]           # each (B,C_in,D+2p,H,W)
    x_taps = jnp.stack(slabs, axis=2)                         # (B,C_in,K*K,D+2p,H,W)
    x_taps = x_taps.transpose(0, 3, 1, 2, 4, 5)               # (B,D+2p,C_in,K*K,H,W)
    x_taps = x_taps.reshape(B, dpad, ckk, HW).astype(jnp.bfloat16)

    # Expand the 2D ACS weight into its sparse 3D form (pad class dim to nc_pad):
    #   group A: taps (kd=p, kh, kw); group C: taps (kd, kh=p, kw); group S: taps (kd, kh, kw=p)
    w3_rows = []
    for co in range(n_classes):
        w2 = weight2d[co].astype(jnp.float32)                 # (C_in, K, K)
        w3 = jnp.zeros((C_in, K, K, K), jnp.float32)          # axes (ci, kd, kh, kw)
        g = group_of[co]
        if g == 0:
            w3 = w3.at[:, p, :, :].set(w2)
        elif g == 1:
            w3 = w3.at[:, :, p, :].set(w2)
        else:
            w3 = w3.at[:, :, :, p].set(w2)
        w3_rows.append(w3)
    w3 = jnp.stack(w3_rows)                                   # (n_classes,C_in,K,K,K)
    w3 = jnp.pad(w3, ((0, nc_pad - n_classes), (0, 0), (0, 0), (0, 0), (0, 0)))
    # -> (K, nc_pad, C_in*K*K); merged row order (ci, kh, kw) matches x_taps rows
    w_all = jnp.transpose(w3, (2, 0, 1, 3, 4)).reshape(K, nc_pad, ckk).astype(jnp.bfloat16)

    bias_p = jnp.pad(bias.astype(jnp.float32), (0, nc_pad - n_classes)).reshape(nc_pad, 1)

    kernel = _make_kernel(nc_pad, hw_tile, D, K)
    out = pl.pallas_call(
        kernel,
        out_shape=jax.ShapeDtypeStruct((B, nc_pad, HW), jnp.float32),
        grid=(B, HW // hw_tile),
        in_specs=[
            pl.BlockSpec((K, nc_pad, ckk), lambda b, j: (0, 0, 0)),        # weights (VMEM)
            pl.BlockSpec((nc_pad, 1), lambda b, j: (0, 0)),                # bias (VMEM)
            pl.BlockSpec((1, dpad, ckk, hw_tile), lambda b, j: (b, 0, 0, j)),
        ],
        out_specs=pl.BlockSpec((1, nc_pad, hw_tile), lambda b, j: (b, 0, j)),
        compiler_params=pltpu.CompilerParams(
            dimension_semantics=("parallel", "parallel"),
            vmem_limit_bytes=32 * 1024 * 1024),
    )(w_all, bias_p, x_taps)

    # drop class padding, restore (B, n_classes, H, W); upsampling=1 / activation=None -> Identity
    return out[:, :n_classes, :].reshape(B, n_classes, H, W)


def segmentation_head_acs_ref(x, weight2d, bias, kernel_size=3):
    """Pure-JAX reference (lax.conv_general_dilated), mirrors ACSConv + max-pool-over-depth."""
    n_classes = weight2d.shape[0]
    K = kernel_size
    p = K // 2
    split = acs_kernel_split(n_classes)
    pads = [[(0, 0), (p, p), (p, p)],
            [(p, p), (0, 0), (p, p)],
            [(p, p), (p, p), (0, 0)]]
    unsq_axis = [2, 3, 4]
    outs, start = [], 0
    for g in range(3):
        n = split[g]
        if n == 0:
            continue
        wg = jnp.expand_dims(weight2d[start:start + n], axis=unsq_axis[g])
        y = lax.conv_general_dilated(
            x, wg, window_strides=(1, 1, 1), padding=pads[g],
            dimension_numbers=("NCDHW", "OIDHW", "NCDHW"),
            precision=lax.Precision.HIGHEST)
        outs.append(y)
        start += n
    y = jnp.concatenate(outs, axis=1) + bias[None, :, None, None, None]
    y = jnp.transpose(y, (0, 1, 3, 4, 2))   # permute(0,1,3,4,2)
    y = jnp.max(y, axis=-1)                 # GlobalPooling(max, keepdim) + squeeze(-1)
    return y


if __name__ == "__main__":
    B, C_in, D, H, W = 2, 4, 8, 16, 16
    n_classes, K = 3, 3

    key = jax.random.PRNGKey(0)
    kx, kw, kb = jax.random.split(key, 3)
    x = jax.random.normal(kx, (B, C_in, D, H, W), dtype=jnp.float32)
    weight2d = (jax.random.normal(kw, (n_classes, C_in, K, K), dtype=jnp.float32)
                * (1.0 / np.sqrt(C_in * K * K)))
    bias = jax.random.normal(kb, (n_classes,), dtype=jnp.float32) * 0.1

    out = jax.block_until_ready(segmentation_head_acs(x, weight2d, bias, kernel_size=K))
    ref = jax.block_until_ready(segmentation_head_acs_ref(x, weight2d, bias, kernel_size=K))

    assert out.shape == (B, n_classes, H, W)
    # bf16 MXU operands (f32 accumulation) vs. the f32 HIGHEST-precision reference:
    # tolerance relaxed per the review's correctness note on the bf16 path.
    np.testing.assert_allclose(np.asarray(out), np.asarray(ref), rtol=3e-2, atol=3e-2)
    print("KERNEL_OK")
</pallas_src>

<mosaic_0001>
module attributes {stable_mosaic.version = 11 : i64} {
  func.func @kernel(%arg0: i32, %arg1: i32, %arg2: memref<3x8x36xbf16, #tpu.memory_space<vmem>>, %arg3: memref<8x1xf32, #tpu.memory_space<vmem>>, %arg4: memref<1x10x36x256xbf16, #tpu.memory_space<vmem>>, %arg5: memref<1x8x256xf32, #tpu.memory_space<vmem>>) attributes {dimension_semantics = [#tpu.dimension_semantics<parallel>, #tpu.dimension_semantics<parallel>], iteration_bounds = array<i64: 2, 1>, scalar_prefetch = 0 : i64, scratch_operands = 0 : i64, tpu.core_type = #tpu.core_type<tc>, window_params = [{pipeline_mode = #tpu.pipeline_mode<synchronous>, transform_indices = @transform_0, window_bounds = array<i64: 3, 8, 36>}, {pipeline_mode = #tpu.pipeline_mode<synchronous>, transform_indices = @transform_1, window_bounds = array<i64: 8, 1>}, {transform_indices = @transform_2, window_bounds = array<i64: 1, 10, 36, 256>}, {transform_indices = @transform_3, window_bounds = array<i64: 1, 8, 256>}]} {
    %cst = arith.constant 0xFF800000 : f32
    %0 = vector.broadcast %cst : f32 to vector<8x256xf32>
    %c0_i32 = arith.constant 0 : i32
    %c0 = arith.constant 0 : index
    %c0_0 = arith.constant 0 : index
    %c0_1 = arith.constant 0 : index
    %1 = vector.load %arg2[%c0, %c0_0, %c0_1] : memref<3x8x36xbf16, #tpu.memory_space<vmem>>, vector<1x8x36xbf16>
    %2 = vector.shape_cast %1 : vector<1x8x36xbf16> to vector<8x36xbf16>
    %c0_2 = arith.constant 0 : index
    %3 = arith.index_cast %c0_i32 : i32 to index
    %c0_3 = arith.constant 0 : index
    %c0_4 = arith.constant 0 : index
    %4 = vector.load %arg4[%c0_2, %3, %c0_3, %c0_4] : memref<1x10x36x256xbf16, #tpu.memory_space<vmem>>, vector<1x1x36x256xbf16>
    %5 = vector.shape_cast %4 : vector<1x1x36x256xbf16> to vector<36x256xbf16>
    %cst_5 = arith.constant dense<0.000000e+00> : vector<8x256xf32>
    %6 = tpu.matmul %2, %5, %cst_5 {dimension_numbers = #tpu.dot_dimension_numbers<[1], [0], [0], [1], [0, 0, 1, 1], [], []>} : vector<8x36xbf16>, vector<36x256xbf16>, vector<8x256xf32> -> vector<8x256xf32>
    %c1 = arith.constant 1 : index
    %c0_6 = arith.constant 0 : index
    %c0_7 = arith.constant 0 : index
    %7 = vector.load %arg2[%c1, %c0_6, %c0_7] : memref<3x8x36xbf16, #tpu.memory_space<vmem>>, vector<1x8x36xbf16>
    %8 = vector.shape_cast %7 : vector<1x8x36xbf16> to vector<8x36xbf16>
    %c1_i32 = arith.constant 1 : i32
    %9 = arith.addi %c0_i32, %c1_i32 : i32
    %c0_8 = arith.constant 0 : index
    %10 = arith.index_cast %9 : i32 to index
    %c0_9 = arith.constant 0 : index
    %c0_10 = arith.constant 0 : index
    %11 = vector.load %arg4[%c0_8, %10, %c0_9, %c0_10] : memref<1x10x36x256xbf16, #tpu.memory_space<vmem>>, vector<1x1x36x256xbf16>
    %12 = vector.shape_cast %11 : vector<1x1x36x256xbf16> to vector<36x256xbf16>
    %cst_11 = arith.constant dense<0.000000e+00> : vector<8x256xf32>
    %13 = tpu.matmul %8, %12, %cst_11 {dimension_numbers = #tpu.dot_dimension_numbers<[1], [0], [0], [1], [0, 0, 1, 1], [], []>} : vector<8x36xbf16>, vector<36x256xbf16>, vector<8x256xf32> -> vector<8x256xf32>
    %14 = arith.addf %6, %13 : vector<8x256xf32>
    %c2 = arith.constant 2 : index
    %c0_12 = arith.constant 0 : index
    %c0_13 = arith.constant 0 : index
    %15 = vector.load %arg2[%c2, %c0_12, %c0_13] : memref<3x8x36xbf16, #tpu.memory_space<vmem>>, vector<1x8x36xbf16>
    %16 = vector.shape_cast %15 : vector<1x8x36xbf16> to vector<8x36xbf16>
    %c2_i32 = arith.constant 2 : i32
    %17 = arith.addi %c0_i32, %c2_i32 : i32
    %c0_14 = arith.constant 0 : index
    %18 = arith.index_cast %17 : i32 to index
    %c0_15 = arith.constant 0 : index
    %c0_16 = arith.constant 0 : index
    %19 = vector.load %arg4[%c0_14, %18, %c0_15, %c0_16] : memref<1x10x36x256xbf16, #tpu.memory_space<vmem>>, vector<1x1x36x256xbf16>
    %20 = vector.shape_cast %19 : vector<1x1x36x256xbf16> to vector<36x256xbf16>
    %cst_17 = arith.constant dense<0.000000e+00> : vector<8x256xf32>
    %21 = tpu.matmul %16, %20, %cst_17 {dimension_numbers = #tpu.dot_dimension_numbers<[1], [0], [0], [1], [0, 0, 1, 1], [], []>} : vector<8x36xbf16>, vector<36x256xbf16>, vector<8x256xf32> -> vector<8x256xf32>
    %22 = arith.addf %14, %21 : vector<8x256xf32>
    %23 = arith.maximumf %0, %22 : vector<8x256xf32>
    %c1_i32_18 = arith.constant 1 : i32
    %c0_19 = arith.constant 0 : index
    %c0_20 = arith.constant 0 : index
    %c0_21 = arith.constant 0 : index
    %24 = vector.load %arg2[%c0_19, %c0_20, %c0_21] : memref<3x8x36xbf16, #tpu.memory_space<vmem>>, vector<1x8x36xbf16>
    %25 = vector.shape_cast %24 : vector<1x8x36xbf16> to vector<8x36xbf16>
    %c0_22 = arith.constant 0 : index
    %26 = arith.index_cast %c1_i32_18 : i32 to index
    %c0_23 = arith.constant 0 : index
    %c0_24 = arith.constant 0 : index
    %27 = vector.load %arg4[%c0_22, %26, %c0_23, %c0_24] : memref<1x10x36x256xbf16, #tpu.memory_space<vmem>>, vector<1x1x36x256xbf16>
    %28 = vector.shape_cast %27 : vector<1x1x36x256xbf16> to vector<36x256xbf16>
    %cst_25 = arith.constant dense<0.000000e+00> : vector<8x256xf32>
    %29 = tpu.matmul %25, %28, %cst_25 {dimension_numbers = #tpu.dot_dimension_numbers<[1], [0], [0], [1], [0, 0, 1, 1], [], []>} : vector<8x36xbf16>, vector<36x256xbf16>, vector<8x256xf32> -> vector<8x256xf32>
    %c1_26 = arith.constant 1 : index
    %c0_27 = arith.constant 0 : index
    %c0_28 = arith.constant 0 : index
    %30 = vector.load %arg2[%c1_26, %c0_27, %c0_28] : memref<3x8x36xbf16, #tpu.memory_space<vmem>>, vector<1x8x36xbf16>
    %31 = vector.shape_cast %30 : vector<1x8x36xbf16> to vector<8x36xbf16>
    %c1_i32_29 = arith.constant 1 : i32
    %32 = arith.addi %c1_i32_18, %c1_i32_29 : i32
    %c0_30 = arith.constant 0 : index
    %33 = arith.index_cast %32 : i32 to index
    %c0_31 = arith.constant 0 : index
    %c0_32 = arith.constant 0 : index
    %34 = vector.load %arg4[%c0_30, %33, %c0_31, %c0_32] : memref<1x10x36x256xbf16, #tpu.memory_space<vmem>>, vector<1x1x36x256xbf16>
    %35 = vector.shape_cast %34 : vector<1x1x36x256xbf16> to vector<36x256xbf16>
    %cst_33 = arith.constant dense<0.000000e+00> : vector<8x256xf32>
    %36 = tpu.matmul %31, %35, %cst_33 {dimension_numbers = #tpu.dot_dimension_numbers<[1], [0], [0], [1], [0, 0, 1, 1], [], []>} : vector<8x36xbf16>, vector<36x256xbf16>, vector<8x256xf32> -> vector<8x256xf32>
    %37 = arith.addf %29, %36 : vector<8x256xf32>
    %c2_34 = arith.constant 2 : index
    %c0_35 = arith.constant 0 : index
    %c0_36 = arith.constant 0 : index
    %38 = vector.load %arg2[%c2_34, %c0_35, %c0_36] : memref<3x8x36xbf16, #tpu.memory_space<vmem>>, vector<1x8x36xbf16>
    %39 = vector.shape_cast %38 : vector<1x8x36xbf16> to vector<8x36xbf16>
    %c2_i32_37 = arith.constant 2 : i32
    %40 = arith.addi %c1_i32_18, %c2_i32_37 : i32
    %c0_38 = arith.constant 0 : index
    %41 = arith.index_cast %40 : i32 to index
    %c0_39 = arith.constant 0 : index
    %c0_40 = arith.constant 0 : index
    %42 = vector.load %arg4[%c0_38, %41, %c0_39, %c0_40] : memref<1x10x36x256xbf16, #tpu.memory_space<vmem>>, vector<1x1x36x256xbf16>
    %43 = vector.shape_cast %42 : vector<1x1x36x256xbf16> to vector<36x256xbf16>
    %cst_41 = arith.constant dense<0.000000e+00> : vector<8x256xf32>
    %44 = tpu.matmul %39, %43, %cst_41 {dimension_numbers = #tpu.dot_dimension_numbers<[1], [0], [0], [1], [0, 0, 1, 1], [], []>} : vector<8x36xbf16>, vector<36x256xbf16>, vector<8x256xf32> -> vector<8x256xf32>
    %45 = arith.addf %37, %44 : vector<8x256xf32>
    %46 = arith.maximumf %23, %45 : vector<8x256xf32>
    %c2_i32_42 = arith.constant 2 : i32
    %c0_43 = arith.constant 0 : index
    %c0_44 = arith.constant 0 : index
    %c0_45 = arith.constant 0 : index
    %47 = vector.load %arg2[%c0_43, %c0_44, %c0_45] : memref<3x8x36xbf16, #tpu.memory_space<vmem>>, vector<1x8x36xbf16>
    %48 = vector.shape_cast %47 : vector<1x8x36xbf16> to vector<8x36xbf16>
    %c0_46 = arith.constant 0 : index
    %49 = arith.index_cast %c2_i32_42 : i32 to index
    %c0_47 = arith.constant 0 : index
    %c0_48 = arith.constant 0 : index
    %50 = vector.load %arg4[%c0_46, %49, %c0_47, %c0_48] : memref<1x10x36x256xbf16, #tpu.memory_space<vmem>>, vector<1x1x36x256xbf16>
    %51 = vector.shape_cast %50 : vector<1x1x36x256xbf16> to vector<36x256xbf16>
    %cst_49 = arith.constant dense<0.000000e+00> : vector<8x256xf32>
    %52 = tpu.matmul %48, %51, %cst_49 {dimension_numbers = #tpu.dot_dimension_numbers<[1], [0], [0], [1], [0, 0, 1, 1], [], []>} : vector<8x36xbf16>, vector<36x256xbf16>, vector<8x256xf32> -> vector<8x256xf32>
    %c1_50 = arith.constant 1 : index
    %c0_51 = arith.constant 0 : index
    %c0_52 = arith.constant 0 : index
    %53 = vector.load %arg2[%c1_50, %c0_51, %c0_52] : memref<3x8x36xbf16, #tpu.memory_space<vmem>>, vector<1x8x36xbf16>
    %54 = vector.shape_cast %53 : vector<1x8x36xbf16> to vector<8x36xbf16>
    %c1_i32_53 = arith.constant 1 : i32
    %55 = arith.addi %c2_i32_42, %c1_i32_53 : i32
    %c0_54 = arith.constant 0 : index
    %56 = arith.index_cast %55 : i32 to index
    %c0_55 = arith.constant 0 : index
    %c0_56 = arith.constant 0 : index
    %57 = vector.load %arg4[%c0_54, %56, %c0_55, %c0_56] : memref<1x10x36x256xbf16, #tpu.memory_space<vmem>>, vector<1x1x36x256xbf16>
    %58 = vector.shape_cast %57 : vector<1x1x36x256xbf16> to vector<36x256xbf16>
    %cst_57 = arith.constant dense<0.000000e+00> : vector<8x256xf32>
    %59 = tpu.matmul %54, %58, %cst_57 {dimension_numbers = #tpu.dot_dimension_numbers<[1], [0], [0], [1], [0, 0, 1, 1], [], []>} : vector<8x36xbf16>, vector<36x256xbf16>, vector<8x256xf32> -> vector<8x256xf32>
    %60 = arith.addf %52, %59 : vector<8x256xf32>
    %c2_58 = arith.constant 2 : index
    %c0_59 = arith.constant 0 : index
    %c0_60 = arith.constant 0 : index
    %61 = vector.load %arg2[%c2_58, %c0_59, %c0_60] : memref<3x8x36xbf16, #tpu.memory_space<vmem>>, vector<1x8x36xbf16>
    %62 = vector.shape_cast %61 : vector<1x8x36xbf16> to vector<8x36xbf16>
    %c2_i32_61 = arith.constant 2 : i32
    %63 = arith.addi %c2_i32_42, %c2_i32_61 : i32
    %c0_62 = arith.constant 0 : index
    %64 = arith.index_cast %63 : i32 to index
    %c0_63 = arith.constant 0 : index
    %c0_64 = arith.constant 0 : index
    %65 = vector.load %arg4[%c0_62, %64, %c0_63, %c0_64] : memref<1x10x36x256xbf16, #tpu.memory_space<vmem>>, vector<1x1x36x256xbf16>
    %66 = vector.shape_cast %65 : vector<1x1x36x256xbf16> to vector<36x256xbf16>
    %cst_65 = arith.constant dense<0.000000e+00> : vector<8x256xf32>
    %67 = tpu.matmul %62, %66, %cst_65 {dimension_numbers = #tpu.dot_dimension_numbers<[1], [0], [0], [1], [0, 0, 1, 1], [], []>} : vector<8x36xbf16>, vector<36x256xbf16>, vector<8x256xf32> -> vector<8x256xf32>
    %68 = arith.addf %60, %67 : vector<8x256xf32>
    %69 = arith.maximumf %46, %68 : vector<8x256xf32>
    %c3_i32 = arith.constant 3 : i32
    %c0_66 = arith.constant 0 : index
    %c0_67 = arith.constant 0 : index
    %c0_68 = arith.constant 0 : index
    %70 = vector.load %arg2[%c0_66, %c0_67, %c0_68] : memref<3x8x36xbf16, #tpu.memory_space<vmem>>, vector<1x8x36xbf16>
    %71 = vector.shape_cast %70 : vector<1x8x36xbf16> to vector<8x36xbf16>
    %c0_69 = arith.constant 0 : index
    %72 = arith.index_cast %c3_i32 : i32 to index
    %c0_70 = arith.constant 0 : index
    %c0_71 = arith.constant 0 : index
    %73 = vector.load %arg4[%c0_69, %72, %c0_70, %c0_71] : memref<1x10x36x256xbf16, #tpu.memory_space<vmem>>, vector<1x1x36x256xbf16>
    %74 = vector.shape_cast %73 : vector<1x1x36x256xbf16> to vector<36x256xbf16>
    %cst_72 = arith.constant dense<0.000000e+00> : vector<8x256xf32>
    %75 = tpu.matmul %71, %74, %cst_72 {dimension_numbers = #tpu.dot_dimension_numbers<[1], [0], [0], [1], [0, 0, 1, 1], [], []>} : vector<8x36xbf16>, vector<36x256xbf16>, vector<8x256xf32> -> vector<8x256xf32>
    %c1_73 = arith.constant 1 : index
    %c0_74 = arith.constant 0 : index
    %c0_75 = arith.constant 0 : index
    %76 = vector.load %arg2[%c1_73, %c0_74, %c0_75] : memref<3x8x36xbf16, #tpu.memory_space<vmem>>, vector<1x8x36xbf16>
    %77 = vector.shape_cast %76 : vector<1x8x36xbf16> to vector<8x36xbf16>
    %c1_i32_76 = arith.constant 1 : i32
    %78 = arith.addi %c3_i32, %c1_i32_76 : i32
    %c0_77 = arith.constant 0 : index
    %79 = arith.index_cast %78 : i32 to index
    %c0_78 = arith.constant 0 : index
    %c0_79 = arith.constant 0 : index
    %80 = vector.load %arg4[%c0_77, %79, %c0_78, %c0_79] : memref<1x10x36x256xbf16, #tpu.memory_space<vmem>>, vector<1x1x36x256xbf16>
    %81 = vector.shape_cast %80 : vector<1x1x36x256xbf16> to vector<36x256xbf16>
    %cst_80 = arith.constant dense<0.000000e+00> : vector<8x256xf32>
    %82 = tpu.matmul %77, %81, %cst_80 {dimension_numbers = #tpu.dot_dimension_numbers<[1], [0], [0], [1], [0, 0, 1, 1], [], []>} : vector<8x36xbf16>, vector<36x256xbf16>, vector<8x256xf32> -> vector<8x256xf32>
    %83 = arith.addf %75, %82 : vector<8x256xf32>
    %c2_81 = arith.constant 2 : index
    %c0_82 = arith.constant 0 : index
    %c0_83 = arith.constant 0 : index
    %84 = vector.load %arg2[%c2_81, %c0_82, %c0_83] : memref<3x8x36xbf16, #tpu.memory_space<vmem>>, vector<1x8x36xbf16>
    %85 = vector.shape_cast %84 : vector<1x8x36xbf16> to vector<8x36xbf16>
    %c2_i32_84 = arith.constant 2 : i32
    %86 = arith.addi %c3_i32, %c2_i32_84 : i32
    %c0_85 = arith.constant 0 : index
    %87 = arith.index_cast %86 : i32 to index
    %c0_86 = arith.constant 0 : index
    %c0_87 = arith.constant 0 : index
    %88 = vector.load %arg4[%c0_85, %87, %c0_86, %c0_87] : memref<1x10x36x256xbf16, #tpu.memory_space<vmem>>, vector<1x1x36x256xbf16>
    %89 = vector.shape_cast %88 : vector<1x1x36x256xbf16> to vector<36x256xbf16>
    %cst_88 = arith.constant dense<0.000000e+00> : vector<8x256xf32>
    %90 = tpu.matmul %85, %89, %cst_88 {dimension_numbers = #tpu.dot_dimension_numbers<[1], [0], [0], [1], [0, 0, 1, 1], [], []>} : vector<8x36xbf16>, vector<36x256xbf16>, vector<8x256xf32> -> vector<8x256xf32>
    %91 = arith.addf %83, %90 : vector<8x256xf32>
    %92 = arith.maximumf %69, %91 : vector<8x256xf32>
    %c4_i32 = arith.constant 4 : i32
    %c0_89 = arith.constant 0 : index
    %c0_90 = arith.constant 0 : index
    %c0_91 = arith.constant 0 : index
    %93 = vector.load %arg2[%c0_89, %c0_90, %c0_91] : memref<3x8x36xbf16, #tpu.memory_space<vmem>>, vector<1x8x36xbf16>
    %94 = vector.shape_cast %93 : vector<1x8x36xbf16> to vector<8x36xbf16>
    %c0_92 = arith.constant 0 : index
    %95 = arith.index_cast %c4_i32 : i32 to index
    %c0_93 = arith.constant 0 : index
    %c0_94 = arith.constant 0 : index
    %96 = vector.load %arg4[%c0_92, %95, %c0_93, %c0_94] : memref<1x10x36x256xbf16, #tpu.memory_space<vmem>>, vector<1x1x36x256xbf16>
    %97 = vector.shape_cast %96 : vector<1x1x36x256xbf16> to vector<36x256xbf16>
    %cst_95 = arith.constant dense<0.000000e+00> : vector<8x256xf32>
    %98 = tpu.matmul %94, %97, %cst_95 {dimension_numbers = #tpu.dot_dimension_numbers<[1], [0], [0], [1], [0, 0, 1, 1], [], []>} : vector<8x36xbf16>, vector<36x256xbf16>, vector<8x256xf32> -> vector<8x256xf32>
    %c1_96 = arith.constant 1 : index
    %c0_97 = arith.constant 0 : index
    %c0_98 = arith.constant 0 : index
    %99 = vector.load %arg2[%c1_96, %c0_97, %c0_98] : memref<3x8x36xbf16, #tpu.memory_space<vmem>>, vector<1x8x36xbf16>
    %100 = vector.shape_cast %99 : vector<1x8x36xbf16> to vector<8x36xbf16>
    %c1_i32_99 = arith.constant 1 : i32
    %101 = arith.addi %c4_i32, %c1_i32_99 : i32
    %c0_100 = arith.constant 0 : index
    %102 = arith.index_cast %101 : i32 to index
    %c0_101 = arith.constant 0 : index
    %c0_102 = arith.constant 0 : index
    %103 = vector.load %arg4[%c0_100, %102, %c0_101, %c0_102] : memref<1x10x36x256xbf16, #tpu.memory_space<vmem>>, vector<1x1x36x256xbf16>
    %104 = vector.shape_cast %103 : vector<1x1x36x256xbf16> to vector<36x256xbf16>
    %cst_103 = arith.constant dense<0.000000e+00> : vector<8x256xf32>
    %105 = tpu.matmul %100, %104, %cst_103 {dimension_numbers = #tpu.dot_dimension_numbers<[1], [0], [0], [1], [0, 0, 1, 1], [], []>} : vector<8x36xbf16>, vector<36x256xbf16>, vector<8x256xf32> -> vector<8x256xf32>
    %106 = arith.addf %98, %105 : vector<8x256xf32>
    %c2_104 = arith.constant 2 : index
    %c0_105 = arith.constant 0 : index
    %c0_106 = arith.constant 0 : index
    %107 = vector.load %arg2[%c2_104, %c0_105, %c0_106] : memref<3x8x36xbf16, #tpu.memory_space<vmem>>, vector<1x8x36xbf16>
    %108 = vector.shape_cast %107 : vector<1x8x36xbf16> to vector<8x36xbf16>
    %c2_i32_107 = arith.constant 2 : i32
    %109 = arith.addi %c4_i32, %c2_i32_107 : i32
    %c0_108 = arith.constant 0 : index
    %110 = arith.index_cast %109 : i32 to index
    %c0_109 = arith.constant 0 : index
    %c0_110 = arith.constant 0 : index
    %111 = vector.load %arg4[%c0_108, %110, %c0_109, %c0_110] : memref<1x10x36x256xbf16, #tpu.memory_space<vmem>>, vector<1x1x36x256xbf16>
    %112 = vector.shape_cast %111 : vector<1x1x36x256xbf16> to vector<36x256xbf16>
    %cst_111 = arith.constant dense<0.000000e+00> : vector<8x256xf32>
    %113 = tpu.matmul %108, %112, %cst_111 {dimension_numbers = #tpu.dot_dimension_numbers<[1], [0], [0], [1], [0, 0, 1, 1], [], []>} : vector<8x36xbf16>, vector<36x256xbf16>, vector<8x256xf32> -> vector<8x256xf32>
    %114 = arith.addf %106, %113 : vector<8x256xf32>
    %115 = arith.maximumf %92, %114 : vector<8x256xf32>
    %c5_i32 = arith.constant 5 : i32
    %c0_112 = arith.constant 0 : index
    %c0_113 = arith.constant 0 : index
    %c0_114 = arith.constant 0 : index
    %116 = vector.load %arg2[%c0_112, %c0_113, %c0_114] : memref<3x8x36xbf16, #tpu.memory_space<vmem>>, vector<1x8x36xbf16>
    %117 = vector.shape_cast %116 : vector<1x8x36xbf16> to vector<8x36xbf16>
    %c0_115 = arith.constant 0 : index
    %118 = arith.index_cast %c5_i32 : i32 to index
    %c0_116 = arith.constant 0 : index
    %c0_117 = arith.constant 0 : index
    %119 = vector.load %arg4[%c0_115, %118, %c0_116, %c0_117] : memref<1x10x36x256xbf16, #tpu.memory_space<vmem>>, vector<1x1x36x256xbf16>
    %120 = vector.shape_cast %119 : vector<1x1x36x256xbf16> to vector<36x256xbf16>
    %cst_118 = arith.constant dense<0.000000e+00> : vector<8x256xf32>
    %121 = tpu.matmul %117, %120, %cst_118 {dimension_numbers = #tpu.dot_dimension_numbers<[1], [0], [0], [1], [0, 0, 1, 1], [], []>} : vector<8x36xbf16>, vector<36x256xbf16>, vector<8x256xf32> -> vector<8x256xf32>
    %c1_119 = arith.constant 1 : index
    %c0_120 = arith.constant 0 : index
    %c0_121 = arith.constant 0 : index
    %122 = vector.load %arg2[%c1_119, %c0_120, %c0_121] : memref<3x8x36xbf16, #tpu.memory_space<vmem>>, vector<1x8x36xbf16>
    %123 = vector.shape_cast %122 : vector<1x8x36xbf16> to vector<8x36xbf16>
    %c1_i32_122 = arith.constant 1 : i32
    %124 = arith.addi %c5_i32, %c1_i32_122 : i32
    %c0_123 = arith.constant 0 : index
    %125 = arith.index_cast %124 : i32 to index
    %c0_124 = arith.constant 0 : index
    %c0_125 = arith.constant 0 : index
    %126 = vector.load %arg4[%c0_123, %125, %c0_124, %c0_125] : memref<1x10x36x256xbf16, #tpu.memory_space<vmem>>, vector<1x1x36x256xbf16>
    %127 = vector.shape_cast %126 : vector<1x1x36x256xbf16> to vector<36x256xbf16>
    %cst_126 = arith.constant dense<0.000000e+00> : vector<8x256xf32>
    %128 = tpu.matmul %123, %127, %cst_126 {dimension_numbers = #tpu.dot_dimension_numbers<[1], [0], [0], [1], [0, 0, 1, 1], [], []>} : vector<8x36xbf16>, vector<36x256xbf16>, vector<8x256xf32> -> vector<8x256xf32>
    %129 = arith.addf %121, %128 : vector<8x256xf32>
    %c2_127 = arith.constant 2 : index
    %c0_128 = arith.constant 0 : index
    %c0_129 = arith.constant 0 : index
    %130 = vector.load %arg2[%c2_127, %c0_128, %c0_129] : memref<3x8x36xbf16, #tpu.memory_space<vmem>>, vector<1x8x36xbf16>
    %131 = vector.shape_cast %130 : vector<1x8x36xbf16> to vector<8x36xbf16>
    %c2_i32_130 = arith.constant 2 : i32
    %132 = arith.addi %c5_i32, %c2_i32_130 : i32
    %c0_131 = arith.constant 0 : index
    %133 = arith.index_cast %132 : i32 to index
    %c0_132 = arith.constant 0 : index
    %c0_133 = arith.constant 0 : index
    %134 = vector.load %arg4[%c0_131, %133, %c0_132, %c0_133] : memref<1x10x36x256xbf16, #tpu.memory_space<vmem>>, vector<1x1x36x256xbf16>
    %135 = vector.shape_cast %134 : vector<1x1x36x256xbf16> to vector<36x256xbf16>
    %cst_134 = arith.constant dense<0.000000e+00> : vector<8x256xf32>
    %136 = tpu.matmul %131, %135, %cst_134 {dimension_numbers = #tpu.dot_dimension_numbers<[1], [0], [0], [1], [0, 0, 1, 1], [], []>} : vector<8x36xbf16>, vector<36x256xbf16>, vector<8x256xf32> -> vector<8x256xf32>
    %137 = arith.addf %129, %136 : vector<8x256xf32>
    %138 = arith.maximumf %115, %137 : vector<8x256xf32>
    %c6_i32 = arith.constant 6 : i32
    %c0_135 = arith.constant 0 : index
    %c0_136 = arith.constant 0 : index
    %c0_137 = arith.constant 0 : index
    %139 = vector.load %arg2[%c0_135, %c0_136, %c0_137] : memref<3x8x36xbf16, #tpu.memory_space<vmem>>, vector<1x8x36xbf16>
    %140 = vector.shape_cast %139 : vector<1x8x36xbf16> to vector<8x36xbf16>
    %c0_138 = arith.constant 0 : index
    %141 = arith.index_cast %c6_i32 : i32 to index
    %c0_139 = arith.constant 0 : index
    %c0_140 = arith.constant 0 : index
    %142 = vector.load %arg4[%c0_138, %141, %c0_139, %c0_140] : memref<1x10x36x256xbf16, #tpu.memory_space<vmem>>, vector<1x1x36x256xbf16>
    %143 = vector.shape_cast %142 : vector<1x1x36x256xbf16> to vector<36x256xbf16>
    %cst_141 = arith.constant dense<0.000000e+00> : vector<8x256xf32>
    %144 = tpu.matmul %140, %143, %cst_141 {dimension_numbers = #tpu.dot_dimension_numbers<[1], [0], [0], [1], [0, 0, 1, 1], [], []>} : vector<8x36xbf16>, vector<36x256xbf16>, vector<8x256xf32> -> vector<8x256xf32>
    %c1_142 = arith.constant 1 : index
    %c0_143 = arith.constant 0 : index
    %c0_144 = arith.constant 0 : index
    %145 = vector.load %arg2[%c1_142, %c0_143, %c0_144] : memref<3x8x36xbf16, #tpu.memory_space<vmem>>, vector<1x8x36xbf16>
    %146 = vector.shape_cast %145 : vector<1x8x36xbf16> to vector<8x36xbf16>
    %c1_i32_145 = arith.constant 1 : i32
    %147 = arith.addi %c6_i32, %c1_i32_145 : i32
    %c0_146 = arith.constant 0 : index
    %148 = arith.index_cast %147 : i32 to index
    %c0_147 = arith.constant 0 : index
    %c0_148 = arith.constant 0 : index
    %149 = vector.load %arg4[%c0_146, %148, %c0_147, %c0_148] : memref<1x10x36x256xbf16, #tpu.memory_space<vmem>>, vector<1x1x36x256xbf16>
    %150 = vector.shape_cast %149 : vector<1x1x36x256xbf16> to vector<36x256xbf16>
    %cst_149 = arith.constant dense<0.000000e+00> : vector<8x256xf32>
    %151 = tpu.matmul %146, %150, %cst_149 {dimension_numbers = #tpu.dot_dimension_numbers<[1], [0], [0], [1], [0, 0, 1, 1], [], []>} : vector<8x36xbf16>, vector<36x256xbf16>, vector<8x256xf32> -> vector<8x256xf32>
    %152 = arith.addf %144, %151 : vector<8x256xf32>
    %c2_150 = arith.constant 2 : index
    %c0_151 = arith.constant 0 : index
    %c0_152 = arith.constant 0 : index
    %153 = vector.load %arg2[%c2_150, %c0_151, %c0_152] : memref<3x8x36xbf16, #tpu.memory_space<vmem>>, vector<1x8x36xbf16>
    %154 = vector.shape_cast %153 : vector<1x8x36xbf16> to vector<8x36xbf16>
    %c2_i32_153 = arith.constant 2 : i32
    %155 = arith.addi %c6_i32, %c2_i32_153 : i32
    %c0_154 = arith.constant 0 : index
    %156 = arith.index_cast %155 : i32 to index
    %c0_155 = arith.constant 0 : index
    %c0_156 = arith.constant 0 : index
    %157 = vector.load %arg4[%c0_154, %156, %c0_155, %c0_156] : memref<1x10x36x256xbf16, #tpu.memory_space<vmem>>, vector<1x1x36x256xbf16>
    %158 = vector.shape_cast %157 : vector<1x1x36x256xbf16> to vector<36x256xbf16>
    %cst_157 = arith.constant dense<0.000000e+00> : vector<8x256xf32>
    %159 = tpu.matmul %154, %158, %cst_157 {dimension_numbers = #tpu.dot_dimension_numbers<[1], [0], [0], [1], [0, 0, 1, 1], [], []>} : vector<8x36xbf16>, vector<36x256xbf16>, vector<8x256xf32> -> vector<8x256xf32>
    %160 = arith.addf %152, %159 : vector<8x256xf32>
    %161 = arith.maximumf %138, %160 : vector<8x256xf32>
    %c7_i32 = arith.constant 7 : i32
    %c0_158 = arith.constant 0 : index
    %c0_159 = arith.constant 0 : index
    %c0_160 = arith.constant 0 : index
    %162 = vector.load %arg2[%c0_158, %c0_159, %c0_160] : memref<3x8x36xbf16, #tpu.memory_space<vmem>>, vector<1x8x36xbf16>
    %163 = vector.shape_cast %162 : vector<1x8x36xbf16> to vector<8x36xbf16>
    %c0_161 = arith.constant 0 : index
    %164 = arith.index_cast %c7_i32 : i32 to index
    %c0_162 = arith.constant 0 : index
    %c0_163 = arith.constant 0 : index
    %165 = vector.load %arg4[%c0_161, %164, %c0_162, %c0_163] : memref<1x10x36x256xbf16, #tpu.memory_space<vmem>>, vector<1x1x36x256xbf16>
    %166 = vector.shape_cast %165 : vector<1x1x36x256xbf16> to vector<36x256xbf16>
    %cst_164 = arith.constant dense<0.000000e+00> : vector<8x256xf32>
    %167 = tpu.matmul %163, %166, %cst_164 {dimension_numbers = #tpu.dot_dimension_numbers<[1], [0], [0], [1], [0, 0, 1, 1], [], []>} : vector<8x36xbf16>, vector<36x256xbf16>, vector<8x256xf32> -> vector<8x256xf32>
    %c1_165 = arith.constant 1 : index
    %c0_166 = arith.constant 0 : index
    %c0_167 = arith.constant 0 : index
    %168 = vector.load %arg2[%c1_165, %c0_166, %c0_167] : memref<3x8x36xbf16, #tpu.memory_space<vmem>>, vector<1x8x36xbf16>
    %169 = vector.shape_cast %168 : vector<1x8x36xbf16> to vector<8x36xbf16>
    %c1_i32_168 = arith.constant 1 : i32
    %170 = arith.addi %c7_i32, %c1_i32_168 : i32
    %c0_169 = arith.constant 0 : index
    %171 = arith.index_cast %170 : i32 to index
    %c0_170 = arith.constant 0 : index
    %c0_171 = arith.constant 0 : index
    %172 = vector.load %arg4[%c0_169, %171, %c0_170, %c0_171] : memref<1x10x36x256xbf16, #tpu.memory_space<vmem>>, vector<1x1x36x256xbf16>
    %173 = vector.shape_cast %172 : vector<1x1x36x256xbf16> to vector<36x256xbf16>
    %cst_172 = arith.constant dense<0.000000e+00> : vector<8x256xf32>
    %174 = tpu.matmul %169, %173, %cst_172 {dimension_numbers = #tpu.dot_dimension_numbers<[1], [0], [0], [1], [0, 0, 1, 1], [], []>} : vector<8x36xbf16>, vector<36x256xbf16>, vector<8x256xf32> -> vector<8x256xf32>
    %175 = arith.addf %167, %174 : vector<8x256xf32>
    %c2_173 = arith.constant 2 : index
    %c0_174 = arith.constant 0 : index
    %c0_175 = arith.constant 0 : index
    %176 = vector.load %arg2[%c2_173, %c0_174, %c0_175] : memref<3x8x36xbf16, #tpu.memory_space<vmem>>, vector<1x8x36xbf16>
    %177 = vector.shape_cast %176 : vector<1x8x36xbf16> to vector<8x36xbf16>
    %c2_i32_176 = arith.constant 2 : i32
    %178 = arith.addi %c7_i32, %c2_i32_176 : i32
    %c0_177 = arith.constant 0 : index
    %179 = arith.index_cast %178 : i32 to index
    %c0_178 = arith.constant 0 : index
    %c0_179 = arith.constant 0 : index
    %180 = vector.load %arg4[%c0_177, %179, %c0_178, %c0_179] : memref<1x10x36x256xbf16, #tpu.memory_space<vmem>>, vector<1x1x36x256xbf16>
    %181 = vector.shape_cast %180 : vector<1x1x36x256xbf16> to vector<36x256xbf16>
    %cst_180 = arith.constant dense<0.000000e+00> : vector<8x256xf32>
    %182 = tpu.matmul %177, %181, %cst_180 {dimension_numbers = #tpu.dot_dimension_numbers<[1], [0], [0], [1], [0, 0, 1, 1], [], []>} : vector<8x36xbf16>, vector<36x256xbf16>, vector<8x256xf32> -> vector<8x256xf32>
    %183 = arith.addf %175, %182 : vector<8x256xf32>
    %184 = arith.maximumf %161, %183 : vector<8x256xf32>
    %c8_i32 = arith.constant 8 : i32
    %c0_181 = arith.constant 0 : index
    %c0_182 = arith.constant 0 : index
    %185 = vector.load %arg3[%c0_181, %c0_182] : memref<8x1xf32, #tpu.memory_space<vmem>>, vector<8x1xf32>
    %186 = vector.broadcast %185 : vector<8x1xf32> to vector<8x256xf32>
    %187 = arith.addf %184, %186 : vector<8x256xf32>
    %c0_183 = arith.constant 0 : index
    %c0_184 = arith.constant 0 : index
    %c0_185 = arith.constant 0 : index
    %188 = vector.load %arg5[%c0_183, %c0_184, %c0_185] : memref<1x8x256xf32, #tpu.memory_space<vmem>>, vector<1x8x256xf32>
    %189 = vector.shape_cast %188 : vector<1x8x256xf32> to vector<8x256xf32>
    %190 = vector.shape_cast %187 : vector<8x256xf32> to vector<1x8x256xf32>
    tpu.vector_store %arg5[%c0_183, %c0_184, %c0_185], %190 {strides = array<i32>} : memref<1x8x256xf32, #tpu.memory_space<vmem>>, vector<1x8x256xf32>,
    return
  }
  func.func @transform_0(%arg0: i32, %arg1: i32) -> (i32, i32, i32) {
    %c0_i32 = arith.constant 0 : i32
    %c0_i32_0 = arith.constant 0 : i32
    %c0_i32_1 = arith.constant 0 : i32
    %c0_i32_2 = arith.constant 0 : i32
    return %c0_i32, %c0_i32_0, %c0_i32_1 : i32, i32, i32
  }
  func.func @transform_1(%arg0: i32, %arg1: i32) -> (i32, i32) {
    %c0_i32 = arith.constant 0 : i32
    %c0_i32_0 = arith.constant 0 : i32
    %c0_i32_1 = arith.constant 0 : i32
    return %c0_i32, %c0_i32_0 : i32, i32
  }
  func.func @transform_2(%arg0: i32, %arg1: i32) -> (i32, i32, i32, i32) {
    %c0_i32 = arith.constant 0 : i32
    %c0_i32_0 = arith.constant 0 : i32
    %c0_i32_1 = arith.constant 0 : i32
    return %arg0, %c0_i32, %c0_i32_0, %arg1 : i32, i32, i32, i32
  }
  func.func @transform_3(%arg0: i32, %arg1: i32) -> (i32, i32, i32) {
    %c0_i32 = arith.constant 0 : i32
    %c0_i32_0 = arith.constant 0 : i32
    return %arg0, %c0_i32, %arg1 : i32, i32, i32
  }
}

</mosaic_0001>

<llo_original>
// kernel: tpu_custom_call.1
$region0: #{tpu_custom_call.1}
  #allocation0 [shape = 'u32[]', space=smem, size = 0x4, offset = 0x4, fixed_abs, tag = 'smem constant byte address 0x4 - core index']
  #allocation1 [shape = 'u32[144,128]{1,0:T(1,128)}', space=vmem, size = 0x12000, scoped, tag = 'internal scratch']
  %s0 = inlined_call_operand.vmem [shape: bf16[3,8,36], index: 0, kind: input, shape index: {}]
  %s1 = inlined_call_operand.vmem [shape: f32[8,1], index: 1, kind: input, shape index: {}]
  %s2 = inlined_call_operand.vmem [shape: bf16[2,10,36,256], index: 2, kind: input, shape index: {}]
  %s3 = inlined_call_operand.hbm [shape: f32[2,8,256], index: 3, kind: output, shape index: {}]
  %s4 = sld [smem:[#allocation0]]
  $region45: #{tpu_custom_call.1} parent=0
    _
  %s6 = ssub.s32 1, %s4
  %s7 = scalar_select 0, %s6, %s4
  $region1: #{tpu_custom_call.1} parent=0
    #allocation2 [shape = 'u8[16384]{0}', space=vmem, size = 0x4000, scoped, tag = 'output window, operand 0']
    #allocation3 [shape = 's32[2]{0}', space=sflag, size = 0x8, scoped, tag = 'scoped memory for tpu_custom_call.1']
    %8 = vsyncpa [#allocation3], 0
    %s9 = scalar_lea.sflag [#allocation3], 1
    %10 = vsyncpa %s9, 0
    loop: start=0, step=1, limit=4
    $region2: #{tpu_custom_call.1} parent=1 // loop_pre_header
      _
    $region3: #{tpu_custom_call.1} parent=1 // loop_header
      %s12 = sphi 0, %s16
      %p13 = scmp.ge.s32.totalorder %s12, 4
      %s19 = sphi 0, %s31
      %s20 = sphi 0, %s27
      %s21 = sphi 0, %s19
      %s22 = sphi 0, %s20
      %s23 = sphi 0, %s21
      %s24 = sphi 0, %s22
      %s32 = sphi 0, %s32
      %s34 = sphi 0, %s32
      %s35 = sphi 0, %s34
      %s49 = sphi 0, %s35
      %s53 = sphi 0, %s53
      %s55 = sphi 0, %s53
      %s56 = sphi 0, %s55
      %s70 = sphi 0, %s56
      %s78 = sphi 0, %s80
      %s81 = sphi 0, %s78
      %s82 = sphi 0, %s81
      %s98 = sphi 0, %s82
      %s106 = sphi 0, %s108
      %s109 = sphi 0, %s106
      %s110 = sphi 0, %s109
      %s126 = sphi 0, %s110
    $region4: #{tpu_custom_call.1} parent=1 // loop_header_branch
      %15 = sbr.rel (%p13) target = $region8
    $region5: #{tpu_custom_call.1} parent=1 // loop_body
      %s17 = ssub.s32 %s12, 1
      %s18 = ssub.s32 %s12, 2
      %s25 = sadd.s32 1, %s20
      %p26 = scmp.ge.s32.totalorder %s25, 1
      %s27 = scalar_select %p26, 0, %s25
      %s28 = sadd.s32 1, %s19
      %s29 = scalar_select %p26, %s28, %s19
      %p30 = scmp.ge.s32.totalorder %s29, 2
      %s31 = scalar_select %p30, 0, %s29
      %s33 = sadd.s32 %s32, 1
      %p36 = scmp.eq.s32.totalorder %s12, 1
      %p37 = scmp.ne.s32.totalorder %s32, %s34
      %p38 = scmp.eq.s32.totalorder %s12, 0
      %p39 = por %p37, %p38
      %p40 = scmp.ne.s32.totalorder %s32, %s34
      %p41 = scmp.eq.s32.totalorder %s17, 1
      %p42 = por %p40, %p41
      %p43 = scmp.ne.s32.totalorder %s34, %s35
      %p44 = scmp.eq.s32.totalorder %s17, 0
      %p45 = por %p43, %p44
      %p46 = scmp.ne.s32.totalorder %s34, %s35
      %p47 = scmp.eq.s32.totalorder %s18, 1
      %p48 = por %p46, %p47
      %p50 = scmp.ne.s32.totalorder %s35, %s49
      %p51 = scmp.eq.s32.totalorder %s18, 0
      %p52 = por %p50, %p51
      %s54 = sadd.s32 %s53, 1
      %p57 = scmp.eq.s32.totalorder %s12, 1
      %p58 = scmp.ne.s32.totalorder %s53, %s55
      %p59 = scmp.eq.s32.totalorder %s12, 0
      %p60 = por %p58, %p59
      %p61 = scmp.ne.s32.totalorder %s53, %s55
      %p62 = scmp.eq.s32.totalorder %s17, 1
      %p63 = por %p61, %p62
      %p64 = scmp.ne.s32.totalorder %s55, %s56
      %p65 = scmp.eq.s32.totalorder %s17, 0
      %p66 = por %p64, %p65
      %p67 = scmp.ne.s32.totalorder %s55, %s56
      %p68 = scmp.eq.s32.totalorder %s18, 1
      %p69 = por %p67, %p68
      %p71 = scmp.ne.s32.totalorder %s56, %s70
      %p72 = scmp.eq.s32.totalorder %s18, 0
      %p73 = por %p71, %p72
      %s74 = ssub.s32 %s19, %s31
      %s75 = ssub.s32 %s20, %s27
      %s76 = sor.u32 %s74, %s75
      %p77 = scmp.eq.s32.totalorder %s76, 0
      %s79 = sadd.s32 %s78, 1
      %s80 = scalar_select %p77, %s78, %s79
      %p83 = pneg %p77
      %p84 = scmp.eq.s32.totalorder %s12, 1
      %p85 = por %p83, %p84
      %p86 = scmp.ne.s32.totalorder %s78, %s81
      %p87 = scmp.eq.s32.totalorder %s12, 0
      %p88 = por %p86, %p87
      %p89 = scmp.ne.s32.totalorder %s78, %s81
      %p90 = scmp.eq.s32.totalorder %s17, 1
      %p91 = por %p89, %p90
      %p92 = scmp.ne.s32.totalorder %s81, %s82
      %p93 = scmp.eq.s32.totalorder %s17, 0
      %p94 = por %p92, %p93
      %p95 = scmp.ne.s32.totalorder %s81, %s82
      %p96 = scmp.eq.s32.totalorder %s18, 1
      %p97 = por %p95, %p96
      %p99 = scmp.ne.s32.totalorder %s82, %s98
      %p100 = scmp.eq.s32.totalorder %s18, 0
      %p101 = por %p99, %p100
      %s102 = ssub.s32 %s19, %s31
      %s103 = ssub.s32 %s20, %s27
      %s104 = sor.u32 %s102, %s103
      %p105 = scmp.eq.s32.totalorder %s104, 0
      %s107 = sadd.s32 %s106, 1
      %s108 = scalar_select %p105, %s106, %s107
      %p111 = pneg %p105
      %p112 = scmp.eq.s32.totalorder %s12, 1
      %p113 = por %p111, %p112
      %p114 = scmp.ne.s32.totalorder %s106, %s109
      %p115 = scmp.eq.s32.totalorder %s12, 0
      %p116 = por %p114, %p115
      %p117 = scmp.ne.s32.totalorder %s106, %s109
      %p118 = scmp.eq.s32.totalorder %s17, 1
      %p119 = por %p117, %p118
      %p120 = scmp.ne.s32.totalorder %s109, %s110
      %p121 = scmp.eq.s32.totalorder %s17, 0
      %p122 = por %p120, %p121
      %p123 = scmp.ne.s32.totalorder %s109, %s110
      %p124 = scmp.eq.s32.totalorder %s18, 1
      %p125 = por %p123, %p124
      %p127 = scmp.ne.s32.totalorder %s110, %s126
      %p128 = scmp.eq.s32.totalorder %s18, 0
      %p129 = por %p127, %p128
      %p130 = scmp.le.s32.totalorder 1, %s12
      %p131 = scmp.lt.s32.totalorder %s12, 3
      %p132 = pnand %p130, %p131
      %p133 = pneg %p132
      // Predicated region
      $region9: #{tpu_custom_call.1} parent=5 // pred_check
        _
      $region10: #{tpu_custom_call.1} parent=5 // pred_check_branch
        %135 = sbr.rel (%p132) target = $region12
      $region11: #{tpu_custom_call.1} parent=5 // pred_region
        %s136 = ssub.s32 %s12, 1
        // Predicated region
        $region13: #{tpu_custom_call.1} parent=11 // pred_check
          %p137 = pneg %p45
        $region14: #{tpu_custom_call.1} parent=11 // pred_check_branch
          %139 = sbr.rel (%p137) target = $region16
        $region15: #{tpu_custom_call.1} parent=11 // pred_region
          _
        $region16: #{tpu_custom_call.1} parent=11 // pred_fallthru
          _
        // Predicated region
        $region17: #{tpu_custom_call.1} parent=11 // pred_check
          %p140 = pneg %p66
        $region18: #{tpu_custom_call.1} parent=11 // pred_check_branch
          %142 = sbr.rel (%p140) target = $region20
        $region19: #{tpu_custom_call.1} parent=11 // pred_region
          _
        $region20: #{tpu_custom_call.1} parent=11 // pred_fallthru
          _
      $region12: #{tpu_custom_call.1} parent=5 // pred_fallthru
        _
      %p143 = scmp.lt.s32.totalorder %s12, 2
      // Predicated region
      $region21: #{tpu_custom_call.1} parent=5 // pred_check
        %p144 = pneg %p143
      $region22: #{tpu_custom_call.1} parent=5 // pred_check_branch
        %146 = sbr.rel (%p144) target = $region24
      $region23: #{tpu_custom_call.1} parent=5 // pred_region
        // Predicated region
        $region25: #{tpu_custom_call.1} parent=23 // pred_check
          %p147 = pneg %p88
        $region26: #{tpu_custom_call.1} parent=23 // pred_check_branch
          %149 = sbr.rel (%p147) target = $region28
        $region27: #{tpu_custom_call.1} parent=23 // pred_region
          %s150 = smul.u32 2, %s20
          %p151 = scmp.lt.s32.totalorder %s19, 1
          %s152 = scalar_select %p151, %s19, 1
          %p153 = scmp.lt.s32.totalorder %s150, 1
          %s154 = scalar_select %p153, %s150, 1
          %s155 = smul.addr %s152, 100
          %s156 = sadd.s32 %s154, %s155
          %s157 = smul.addr %s156, 4
          %s158 = scalar_lea.vmem %s2, %s157
          %s159 = smul.u32 2, %s20
        $region28: #{tpu_custom_call.1} parent=23 // pred_fallthru
          _
      $region24: #{tpu_custom_call.1} parent=5 // pred_fallthru
        _
      %p160 = scmp.le.s32.totalorder 1, %s12
      %p161 = scmp.lt.s32.totalorder %s12, 3
      %p162 = pnand %p160, %p161
      %p163 = pneg %p162
      // Predicated region
      $region29: #{tpu_custom_call.1} parent=5 // pred_check
        _
      $region30: #{tpu_custom_call.1} parent=5 // pred_check_branch
        %165 = sbr.rel (%p162) target = $region32
      $region31: #{tpu_custom_call.1} parent=5 // pred_region
        %s166 = ssub.s32 %s12, 1
        %p167 = pneg %p45
        %p168 = pneg %p42
        %p169 = pneg %p66
        %p170 = pneg %p63
        %s171 = smul.u32 2, %s22
        %p172 = scmp.lt.s32.totalorder %s21, 1
        %s173 = scalar_select %p172, %s21, 1
        %p174 = scmp.lt.s32.totalorder %s171, 1
        %s175 = scalar_select %p174, %s171, 1
        %s176 = smul.addr %s173, 100
        %s177 = sadd.s32 %s175, %s176
        %s178 = smul.addr %s177, 4
        %s179 = scalar_lea.vmem %s2, %s178
        %p180 = pneg %p94
        %p181 = pneg %p91
        %p182 = pneg %p122
        %p183 = pneg %p119
        %s184 = sand.u32 %s109, 1
        %s185 = scalar_lea.sflag [#allocation3], %s184
        %s186 = sand.u32 %s109, 1
        %s187 = smul.addr %s186, 16
        %s188 = scalar_lea.vmem [#allocation2], %s187
        %s189 = smul.u32 2, %s22
        %p190 = scmp.lt.s32.totalorder %s21, 1
        %s191 = scalar_select %p190, %s21, 1
        %p192 = scmp.lt.s32.totalorder %s189, 1
        %s193 = scalar_select %p192, %s189, 1
        %s194 = smul.addr %s191, 100
        %s195 = sadd.s32 %s193, %s194
        %s196 = smul.addr %s195, 4
        %s197 = scalar_lea.vmem %s2, %s196
        %s198 = smul.u32 2, %s22
        %s199 = smul.u32 2, %s22
        %v201 = vld [vmem:[%s0] sm:$0xf]
        %v202 = vld [vmem:[%s197] sm:$0xff]
        %v203 = vld [vmem:[%s197 + $0x8] sm:$0xff]
        %v204 = vld [vmem:[%s197 + $0x10] sm:$0xff]
        %v205 = vld [vmem:[%s197 + $0x18] sm:$0xff]
        %v206 = vld [vmem:[%s197 + $0x20] sm:$0x33]
        %s207 = scalar_lea.vmem %s0, 4
        %v208 = vld [vmem:[%s207] sm:$0xf]
        %s209 = scalar_lea.vmem %s197, 40
        %v210 = vld [vmem:[%s209] sm:$0xff]
        %v211 = vld [vmem:[%s209 + $0x8] sm:$0xff]
        %v212 = vld [vmem:[%s209 + $0x10] sm:$0xff]
        %v213 = vld [vmem:[%s209 + $0x18] sm:$0xff]
        %v214 = vld [vmem:[%s209 + $0x20] sm:$0x33]
        %v220 = vunpack.c.l.b16 %v210
        %v221 = vunpack.c.h.b16 %v210
        %v222 = vunpack.c.l.b16 %v211
        %v223 = vunpack.c.h.b16 %v211
        %v224 = vunpack.c.l.b16 %v212
        %v225 = vunpack.c.h.b16 %v212
        %v226 = vunpack.c.l.b16 %v213
        %v227 = vunpack.c.h.b16 %v213
        %v228 = vunpack.c.l.b16 %v214
        %v229 = vunpack.c.h.b16 %v214
        %v230 = vpack.c.b16 %v222, %v220
        %v231 = vpack.c.b16 %v223, %v221
        %v232 = vpack.c.b16 %v226, %v224
        %v233 = vpack.c.b16 %v227, %v225
        %v234 = vpack.c.b16 %v228, %v228
        %v235 = vpack.c.b16 %v229, %v229
        %vm240 = vcmask 293888
        %v242 = vsel %vm240, %v208, 0
        %vm244 = vcmask 1041408
        %v246 = vsel %vm244, %v234, 0
        %v249 = vsel %vm244, %v235, 0
        %251 = vmatprep.subr.bf16.mxu0 %v231
        %252 = vmatpush1.bf16.msra.mxu0 %v230
        %253 = vmatprep.subr.bf16.mxu0 %v233
        %254 = vmatpush1.bf16.msra.mxu0 %v232
        %255 = vmatprep.subr.bf16.mxu0 %v249
        %256 = vmatpush1.bf16.msra.mxu0 %v246
        %257 = vmatprep.subr.bf16.mxu0 0
        %258 = vmatpush1.bf16.msra.mxu0 0
        %259 = vmatprep.subr.bf16.mxu0 0
        %260 = vmatpush1.bf16.msra.mxu0 0
        %261 = vmatprep.subr.bf16.mxu0 0
        %262 = vmatpush1.bf16.msra.mxu0 0
        %263 = vmatprep.subr.bf16.mxu0 0
        %264 = vmatpush1.bf16.msra.mxu0 0
        %265 = vmatprep.subr.bf16.mxu0 0
        %266 = vmatpush1.bf16.msra.mxu0 0
        %267 = vmatprep.subr.bf16.mxu0 0
        %268 = vmatpush1.bf16.msra.mxu0 0
        %269 = vmatprep.subr.bf16.mxu0 0
        %270 = vmatpush1.bf16.msra.mxu0 0
        %271 = vmatprep.subr.bf16.mxu0 0
        %272 = vmatpush1.bf16.msra.mxu0 0
        %273 = vmatprep.subr.bf16.mxu0 0
        %274 = vmatpush1.bf16.msra.mxu0 0
        %275 = vmatprep.subr.bf16.mxu0 0
        %276 = vmatpush1.bf16.msra.mxu0 0
        %277 = vmatprep.subr.bf16.mxu0 0
        %278 = vmatpush1.bf16.msra.mxu0 0
        %279 = vmatprep.subr.bf16.mxu0 0
        %280 = vmatpush1.bf16.msra.mxu0 0
        %281 = vmatprep.subr.bf16.mxu0 0
        %282 = vmatpush1.bf16.msra.mxu0 0
        %283 = vmatprep.mubr.bf16.mxu0 0
        %284 = vmatmul.mubr.bf16.gmra.mrb[0].mxu0 %v242
        %v285 = vpop.f32.mrb[0].mxu0
        %v286 = vadd.f32 0.0, %v285
        %v287 = vpop.f32.mrb[0].mxu0
        %v288 = vadd.f32 0.0, %v287
        %v289 = vpop.f32.mrb[0].mxu0
        %v290 = vpop.f32.mrb[0].mxu0
        %291 = vdwg.mxu0
        %v297 = vunpack.c.l.b16 %v202
        %v298 = vunpack.c.h.b16 %v202
        %v299 = vunpack.c.l.b16 %v203
        %v300 = vunpack.c.h.b16 %v203
        %v301 = vunpack.c.l.b16 %v204
        %v302 = vunpack.c.h.b16 %v204
        %v303 = vunpack.c.l.b16 %v205
        %v304 = vunpack.c.h.b16 %v205
        %v305 = vunpack.c.l.b16 %v206
        %v306 = vunpack.c.h.b16 %v206
        %v307 = vpack.c.b16 %v299, %v297
        %v308 = vpack.c.b16 %v300, %v298
        %v309 = vpack.c.b16 %v303, %v301
        %v310 = vpack.c.b16 %v304, %v302
        %v311 = vpack.c.b16 %v305, %v305
        %v312 = vpack.c.b16 %v306, %v306
        %v318 = vsel %vm240, %v201, 0
        %v321 = vsel %vm244, %v311, 0
        %v324 = vsel %vm244, %v312, 0
        %326 = vmatprep.subr.bf16.mxu0 %v308
        %327 = vmatpush1.bf16.msra.mxu0 %v307
        %328 = vmatprep.subr.bf16.mxu0 %v310
        %329 = vmatpush1.bf16.msra.mxu0 %v309
        %330 = vmatprep.subr.bf16.mxu0 %v324
        %331 = vmatpush1.bf16.msra.mxu0 %v321
        %332 = vmatprep.subr.bf16.mxu0 0
        %333 = vmatpush1.bf16.msra.mxu0 0
        %334 = vmatprep.subr.bf16.mxu0 0
        %335 = vmatpush1.bf16.msra.mxu0 0
        %336 = vmatprep.subr.bf16.mxu0 0
        %337 = vmatpush1.bf16.msra.mxu0 0
        %338 = vmatprep.subr.bf16.mxu0 0
        %339 = vmatpush1.bf16.msra.mxu0 0
        %340 = vmatprep.subr.bf16.mxu0 0
        %341 = vmatpush1.bf16.msra.mxu0 0
        %342 = vmatprep.subr.bf16.mxu0 0
        %343 = vmatpush1.bf16.msra.mxu0 0
        %344 = vmatprep.subr.bf16.mxu0 0
        %345 = vmatpush1.bf16.msra.mxu0 0
        %346 = vmatprep.subr.bf16.mxu0 0
        %347 = vmatpush1.bf16.msra.mxu0 0
        %348 = vmatprep.subr.bf16.mxu0 0
        %349 = vmatpush1.bf16.msra.mxu0 0
        %350 = vmatprep.subr.bf16.mxu0 0
        %351 = vmatpush1.bf16.msra.mxu0 0
        %352 = vmatprep.subr.bf16.mxu0 0
        %353 = vmatpush1.bf16.msra.mxu0 0
        %354 = vmatprep.subr.bf16.mxu0 0
        %355 = vmatpush1.bf16.msra.mxu0 0
        %356 = vmatprep.subr.bf16.mxu0 0
        %357 = vmatpush1.bf16.msra.mxu0 0
        %358 = vmatprep.mubr.bf16.mxu0 0
        %359 = vmatmul.mubr.bf16.gmra.mrb[0].mxu0 %v318
        %v360 = vpop.f32.mrb[0].mxu0
        %v361 = vadd.f32 %v286, %v360
        %v362 = vpop.f32.mrb[0].mxu0
        %v363 = vadd.f32 %v288, %v362
        %v364 = vpop.f32.mrb[0].mxu0
        %v365 = vpop.f32.mrb[0].mxu0
        %366 = vdwg.mxu0
        %s367 = scalar_lea.vmem %s0, 8
        %v368 = vld [vmem:[%s367] sm:$0xf]
        %s369 = scalar_lea.vmem %s197, 80
        %v370 = vld [vmem:[%s369] sm:$0xff]
        %v371 = vld [vmem:[%s369 + $0x8] sm:$0xff]
        %v372 = vld [vmem:[%s369 + $0x10] sm:$0xff]
        %v373 = vld [vmem:[%s369 + $0x18] sm:$0xff]
        %v374 = vld [vmem:[%s369 + $0x20] sm:$0x33]
        %v380 = vunpack.c.l.b16 %v370
        %v381 = vunpack.c.h.b16 %v370
        %v382 = vunpack.c.l.b16 %v371
        %v383 = vunpack.c.h.b16 %v371
        %v384 = vunpack.c.l.b16 %v372
        %v385 = vunpack.c.h.b16 %v372
        %v386 = vunpack.c.l.b16 %v373
        %v387 = vunpack.c.h.b16 %v373
        %v388 = vunpack.c.l.b16 %v374
        %v389 = vunpack.c.h.b16 %v374
        %v390 = vpack.c.b16 %v382, %v380
        %v391 = vpack.c.b16 %v383, %v381
        %v392 = vpack.c.b16 %v386, %v384
        %v393 = vpack.c.b16 %v387, %v385
        %v394 = vpack.c.b16 %v388, %v388
        %v395 = vpack.c.b16 %v389, %v389
        %v401 = vsel %vm240, %v368, 0
        %v404 = vsel %vm244, %v394, 0
        %v407 = vsel %vm244, %v395, 0
        %409 = vmatprep.subr.bf16.mxu0 %v391
        %410 = vmatpush1.bf16.msra.mxu0 %v390
        %411 = vmatprep.subr.bf16.mxu0 %v393
        %412 = vmatpush1.bf16.msra.mxu0 %v392
        %413 = vmatprep.subr.bf16.mxu0 %v407
        %414 = vmatpush1.bf16.msra.mxu0 %v404
        %415 = vmatprep.subr.bf16.mxu0 0
        %416 = vmatpush1.bf16.msra.mxu0 0
        %417 = vmatprep.subr.bf16.mxu0 0
        %418 = vmatpush1.bf16.msra.mxu0 0
        %419 = vmatprep.subr.bf16.mxu0 0
        %420 = vmatpush1.bf16.msra.mxu0 0
        %421 = vmatprep.subr.bf16.mxu0 0
        %422 = vmatpush1.bf16.msra.mxu0 0
        %423 = vmatprep.subr.bf16.mxu0 0
        %424 = vmatpush1.bf16.msra.mxu0 0
        %425 = vmatprep.subr.bf16.mxu0 0
        %426 = vmatpush1.bf16.msra.mxu0 0
        %427 = vmatprep.subr.bf16.mxu0 0
        %428 = vmatpush1.bf16.msra.mxu0 0
        %429 = vmatprep.subr.bf16.mxu0 0
        %430 = vmatpush1.bf16.msra.mxu0 0
        %431 = vmatprep.subr.bf16.mxu0 0
        %432 = vmatpush1.bf16.msra.mxu0 0
        %433 = vmatprep.subr.bf16.mxu0 0
        %434 = vmatpush1.bf16.msra.mxu0 0
        %435 = vmatprep.subr.bf16.mxu0 0
        %436 = vmatpush1.bf16.msra.mxu0 0
        %437 = vmatprep.subr.bf16.mxu0 0
        %438 = vmatpush1.bf16.msra.mxu0 0
        %439 = vmatprep.subr.bf16.mxu0 0
        %440 = vmatpush1.bf16.msra.mxu0 0
        %441 = vmatprep.mubr.bf16.mxu0 0
        %442 = vmatmul.mubr.bf16.gmra.mrb[0].mxu0 %v401
        %v443 = vpop.f32.mrb[0].mxu0
        %v444 = vadd.f32 0.0, %v443
        %v445 = vpop.f32.mrb[0].mxu0
        %v446 = vadd.f32 0.0, %v445
        %v447 = vpop.f32.mrb[0].mxu0
        %v448 = vpop.f32.mrb[0].mxu0
        %449 = vdwg.mxu0
        %v450 = vadd.f32 %v361, %v444
        %v451 = vadd.f32 %v363, %v446
        %452 = vmatprep.subr.bf16.mxu0 %v391
        %453 = vmatpush1.bf16.msra.mxu0 %v390
        %454 = vmatprep.subr.bf16.mxu0 %v393
        %455 = vmatpush1.bf16.msra.mxu0 %v392
        %456 = vmatprep.subr.bf16.mxu0 %v407
        %457 = vmatpush1.bf16.msra.mxu0 %v404
        %458 = vmatprep.subr.bf16.mxu0 0
        %459 = vmatpush1.bf16.msra.mxu0 0
        %460 = vmatprep.subr.bf16.mxu0 0
        %461 = vmatpush1.bf16.msra.mxu0 0
        %462 = vmatprep.subr.bf16.mxu0 0
        %463 = vmatpush1.bf16.msra.mxu0 0
        %464 = vmatprep.subr.bf16.mxu0 0
        %465 = vmatpush1.bf16.msra.mxu0 0
        %466 = vmatprep.subr.bf16.mxu0 0
        %467 = vmatpush1.bf16.msra.mxu0 0
        %468 = vmatprep.subr.bf16.mxu0 0
        %469 = vmatpush1.bf16.msra.mxu0 0
        %470 = vmatprep.subr.bf16.mxu0 0
        %471 = vmatpush1.bf16.msra.mxu0 0
        %472 = vmatprep.subr.bf16.mxu0 0
        %473 = vmatpush1.bf16.msra.mxu0 0
        %474 = vmatprep.subr.bf16.mxu0 0
        %475 = vmatpush1.bf16.msra.mxu0 0
        %476 = vmatprep.subr.bf16.mxu0 0
        %477 = vmatpush1.bf16.msra.mxu0 0
        %478 = vmatprep.subr.bf16.mxu0 0
        %479 = vmatpush1.bf16.msra.mxu0 0
        %480 = vmatprep.subr.bf16.mxu0 0
        %481 = vmatpush1.bf16.msra.mxu0 0
        %482 = vmatprep.subr.bf16.mxu0 0
        %483 = vmatpush1.bf16.msra.mxu0 0
        %484 = vmatprep.mubr.bf16.mxu0 0
        %485 = vmatmul.mubr.bf16.gmra.mrb[0].mxu0 %v242
        %v486 = vpop.f32.mrb[0].mxu0
        %v487 = vadd.f32 0.0, %v486
        %v488 = vpop.f32.mrb[0].mxu0
        %v489 = vadd.f32 0.0, %v488
        %v490 = vpop.f32.mrb[0].mxu0
        %v491 = vpop.f32.mrb[0].mxu0
        %492 = vdwg.mxu0
        %493 = vmatprep.subr.bf16.mxu0 %v231
        %494 = vmatpush1.bf16.msra.mxu0 %v230
        %495 = vmatprep.subr.bf16.mxu0 %v233
        %496 = vmatpush1.bf16.msra.mxu0 %v232
        %497 = vmatprep.subr.bf16.mxu0 %v249
        %498 = vmatpush1.bf16.msra.mxu0 %v246
        %499 = vmatprep.subr.bf16.mxu0 0
        %500 = vmatpush1.bf16.msra.mxu0 0
        %501 = vmatprep.subr.bf16.mxu0 0
        %502 = vmatpush1.bf16.msra.mxu0 0
        %503 = vmatprep.subr.bf16.mxu0 0
        %504 = vmatpush1.bf16.msra.mxu0 0
        %505 = vmatprep.subr.bf16.mxu0 0
        %506 = vmatpush1.bf16.msra.mxu0 0
        %507 = vmatprep.subr.bf16.mxu0 0
        %508 = vmatpush1.bf16.msra.mxu0 0
        %509 = vmatprep.subr.bf16.mxu0 0
        %510 = vmatpush1.bf16.msra.mxu0 0
        %511 = vmatprep.subr.bf16.mxu0 0
        %512 = vmatpush1.bf16.msra.mxu0 0
        %513 = vmatprep.subr.bf16.mxu0 0
        %514 = vmatpush1.bf16.msra.mxu0 0
        %515 = vmatprep.subr.bf16.mxu0 0
        %516 = vmatpush1.bf16.msra.mxu0 0
        %517 = vmatprep.subr.bf16.mxu0 0
        %518 = vmatpush1.bf16.msra.mxu0 0
        %519 = vmatprep.subr.bf16.mxu0 0
        %520 = vmatpush1.bf16.msra.mxu0 0
        %521 = vmatprep.subr.bf16.mxu0 0
        %522 = vmatpush1.bf16.msra.mxu0 0
        %523 = vmatprep.subr.bf16.mxu0 0
        %524 = vmatpush1.bf16.msra.mxu0 0
        %525 = vmatprep.mubr.bf16.mxu0 0
        %526 = vmatmul.mubr.bf16.gmra.mrb[0].mxu0 %v318
        %v527 = vpop.f32.mrb[0].mxu0
        %v528 = vadd.f32 %v487, %v527
        %v529 = vpop.f32.mrb[0].mxu0
        %v530 = vadd.f32 %v489, %v529
        %v531 = vpop.f32.mrb[0].mxu0
        %v532 = vpop.f32.mrb[0].mxu0
        %533 = vdwg.mxu0
        %s534 = scalar_lea.vmem %s197, 120
        %v535 = vld [vmem:[%s534] sm:$0xff]
        %v536 = vld [vmem:[%s534 + $0x8] sm:$0xff]
        %v537 = vld [vmem:[%s534 + $0x10] sm:$0xff]
        %v538 = vld [vmem:[%s534 + $0x18] sm:$0xff]
        %v539 = vld [vmem:[%s534 + $0x20] sm:$0x33]
        %v545 = vunpack.c.l.b16 %v535
        %v546 = vunpack.c.h.b16 %v535
        %v547 = vunpack.c.l.b16 %v536
        %v548 = vunpack.c.h.b16 %v536
        %v549 = vunpack.c.l.b16 %v537
        %v550 = vunpack.c.h.b16 %v537
        %v551 = vunpack.c.l.b16 %v538
        %v552 = vunpack.c.h.b16 %v538
        %v553 = vunpack.c.l.b16 %v539
        %v554 = vunpack.c.h.b16 %v539
        %v555 = vpack.c.b16 %v547, %v545
        %v556 = vpack.c.b16 %v548, %v546
        %v557 = vpack.c.b16 %v551, %v549
        %v558 = vpack.c.b16 %v552, %v550
        %v559 = vpack.c.b16 %v553, %v553
        %v560 = vpack.c.b16 %v554, %v554
        %v566 = vsel %vm244, %v559, 0
        %v569 = vsel %vm244, %v560, 0
        %571 = vmatprep.subr.bf16.mxu0 %v556
        %572 = vmatpush1.bf16.msra.mxu0 %v555
        %573 = vmatprep.subr.bf16.mxu0 %v558
        %574 = vmatpush1.bf16.msra.mxu0 %v557
        %575 = vmatprep.subr.bf16.mxu0 %v569
        %576 = vmatpush1.bf16.msra.mxu0 %v566
        %577 = vmatprep.subr.bf16.mxu0 0
        %578 = vmatpush1.bf16.msra.mxu0 0
        %579 = vmatprep.subr.bf16.mxu0 0
        %580 = vmatpush1.bf16.msra.mxu0 0
        %581 = vmatprep.subr.bf16.mxu0 0
        %582 = vmatpush1.bf16.msra.mxu0 0
        %583 = vmatprep.subr.bf16.mxu0 0
        %584 = vmatpush1.bf16.msra.mxu0 0
        %585 = vmatprep.subr.bf16.mxu0 0
        %586 = vmatpush1.bf16.msra.mxu0 0
        %587 = vmatprep.subr.bf16.mxu0 0
        %588 = vmatpush1.bf16.msra.mxu0 0
        %589 = vmatprep.subr.bf16.mxu0 0
        %590 = vmatpush1.bf16.msra.mxu0 0
        %591 = vmatprep.subr.bf16.mxu0 0
        %592 = vmatpush1.bf16.msra.mxu0 0
        %593 = vmatprep.subr.bf16.mxu0 0
        %594 = vmatpush1.bf16.msra.mxu0 0
        %595 = vmatprep.subr.bf16.mxu0 0
        %596 = vmatpush1.bf16.msra.mxu0 0
        %597 = vmatprep.subr.bf16.mxu0 0
        %598 = vmatpush1.bf16.msra.mxu0 0
        %599 = vmatprep.subr.bf16.mxu0 0
        %600 = vmatpush1.bf16.msra.mxu0 0
        %601 = vmatprep.subr.bf16.mxu0 0
        %602 = vmatpush1.bf16.msra.mxu0 0
        %603 = vmatprep.mubr.bf16.mxu0 0
        %604 = vmatmul.mubr.bf16.gmra.mrb[0].mxu0 %v401
        %v605 = vpop.f32.mrb[0].mxu0
        %v606 = vadd.f32 0.0, %v605
        %v607 = vpop.f32.mrb[0].mxu0
        %v608 = vadd.f32 0.0, %v607
        %v609 = vpop.f32.mrb[0].mxu0
        %v610 = vpop.f32.mrb[0].mxu0
        %611 = vdwg.mxu0
        %v612 = vadd.f32 %v528, %v606
        %v613 = vadd.f32 %v530, %v608
        %v614 = vmax.f32 %v450, %v612
        %v615 = vmax.f32 %v451, %v613
        %616 = vmatprep.subr.bf16.mxu0 %v556
        %617 = vmatpush1.bf16.msra.mxu0 %v555
        %618 = vmatprep.subr.bf16.mxu0 %v558
        %619 = vmatpush1.bf16.msra.mxu0 %v557
        %620 = vmatprep.subr.bf16.mxu0 %v569
        %621 = vmatpush1.bf16.msra.mxu0 %v566
        %622 = vmatprep.subr.bf16.mxu0 0
        %623 = vmatpush1.bf16.msra.mxu0 0
        %624 = vmatprep.subr.bf16.mxu0 0
        %625 = vmatpush1.bf16.msra.mxu0 0
        %626 = vmatprep.subr.bf16.mxu0 0
        %627 = vmatpush1.bf16.msra.mxu0 0
        %628 = vmatprep.subr.bf16.mxu0 0
        %629 = vmatpush1.bf16.msra.mxu0 0
        %630 = vmatprep.subr.bf16.mxu0 0
        %631 = vmatpush1.bf16.msra.mxu0 0
        %632 = vmatprep.subr.bf16.mxu0 0
        %633 = vmatpush1.bf16.msra.mxu0 0
        %634 = vmatprep.subr.bf16.mxu0 0
        %635 = vmatpush1.bf16.msra.mxu0 0
        %636 = vmatprep.subr.bf16.mxu0 0
        %637 = vmatpush1.bf16.msra.mxu0 0
        %638 = vmatprep.subr.bf16.mxu0 0
        %639 = vmatpush1.bf16.msra.mxu0 0
        %640 = vmatprep.subr.bf16.mxu0 0
        %641 = vmatpush1.bf16.msra.mxu0 0
        %642 = vmatprep.subr.bf16.mxu0 0
        %643 = vmatpush1.bf16.msra.mxu0 0
        %644 = vmatprep.subr.bf16.mxu0 0
        %645 = vmatpush1.bf16.msra.mxu0 0
        %646 = vmatprep.subr.bf16.mxu0 0
        %647 = vmatpush1.bf16.msra.mxu0 0
        %648 = vmatprep.mubr.bf16.mxu0 0
        %649 = vmatmul.mubr.bf16.gmra.mrb[0].mxu0 %v242
        %v650 = vpop.f32.mrb[0].mxu0
        %v651 = vadd.f32 0.0, %v650
        %v652 = vpop.f32.mrb[0].mxu0
        %v653 = vadd.f32 0.0, %v652
        %v654 = vpop.f32.mrb[0].mxu0
        %v655 = vpop.f32.mrb[0].mxu0
        %656 = vdwg.mxu0
        %657 = vmatprep.subr.bf16.mxu0 %v391
        %658 = vmatpush1.bf16.msra.mxu0 %v390
        %659 = vmatprep.subr.bf16.mxu0 %v393
        %660 = vmatpush1.bf16.msra.mxu0 %v392
        %661 = vmatprep.subr.bf16.mxu0 %v407
        %662 = vmatpush1.bf16.msra.mxu0 %v404
        %663 = vmatprep.subr.bf16.mxu0 0
        %664 = vmatpush1.bf16.msra.mxu0 0
        %665 = vmatprep.subr.bf16.mxu0 0
        %666 = vmatpush1.bf16.msra.mxu0 0
        %667 = vmatprep.subr.bf16.mxu0 0
        %668 = vmatpush1.bf16.msra.mxu0 0
        %669 = vmatprep.subr.bf16.mxu0 0
        %670 = vmatpush1.bf16.msra.mxu0 0
        %671 = vmatprep.subr.bf16.mxu0 0
        %672 = vmatpush1.bf16.msra.mxu0 0
        %673 = vmatprep.subr.bf16.mxu0 0
        %674 = vmatpush1.bf16.msra.mxu0 0
        %675 = vmatprep.subr.bf16.mxu0 0
        %676 = vmatpush1.bf16.msra.mxu0 0
        %677 = vmatprep.subr.bf16.mxu0 0
        %678 = vmatpush1.bf16.msra.mxu0 0
        %679 = vmatprep.subr.bf16.mxu0 0
        %680 = vmatpush1.bf16.msra.mxu0 0
        %681 = vmatprep.subr.bf16.mxu0 0
        %682 = vmatpush1.bf16.msra.mxu0 0
        %683 = vmatprep.subr.bf16.mxu0 0
        %684 = vmatpush1.bf16.msra.mxu0 0
        %685 = vmatprep.subr.bf16.mxu0 0
        %686 = vmatpush1.bf16.msra.mxu0 0
        %687 = vmatprep.subr.bf16.mxu0 0
        %688 = vmatpush1.bf16.msra.mxu0 0
        %689 = vmatprep.mubr.bf16.mxu0 0
        %690 = vmatmul.mubr.bf16.gmra.mrb[0].mxu0 %v318
        %v691 = vpop.f32.mrb[0].mxu0
        %v692 = vadd.f32 %v651, %v691
        %v693 = vpop.f32.mrb[0].mxu0
        %v694 = vadd.f32 %v653, %v693
        %v695 = vpop.f32.mrb[0].mxu0
        %v696 = vpop.f32.mrb[0].mxu0
        %697 = vdwg.mxu0
        %s698 = scalar_lea.vmem %s197, 160
        %v699 = vld [vmem:[%s698] sm:$0xff]
        %v700 = vld [vmem:[%s698 + $0x8] sm:$0xff]
        %v701 = vld [vmem:[%s698 + $0x10] sm:$0xff]
        %v702 = vld [vmem:[%s698 + $0x18] sm:$0xff]
        %v703 = vld [vmem:[%s698 + $0x20] sm:$0x33]
        %v709 = vunpack.c.l.b16 %v699
        %v710 = vunpack.c.h.b16 %v699
        %v711 = vunpack.c.l.b16 %v700
        %v712 = vunpack.c.h.b16 %v700
        %v713 = vunpack.c.l.b16 %v701
        %v714 = vunpack.c.h.b16 %v701
        %v715 = vunpack.c.l.b16 %v702
        %v716 = vunpack.c.h.b16 %v702
        %v717 = vunpack.c.l.b16 %v703
        %v718 = vunpack.c.h.b16 %v703
        %v719 = vpack.c.b16 %v711, %v709
        %v720 = vpack.c.b16 %v712, %v710
        %v721 = vpack.c.b16 %v715, %v713
        %v722 = vpack.c.b16 %v716, %v714
        %v723 = vpack.c.b16 %v717, %v717
        %v724 = vpack.c.b16 %v718, %v718
        %v730 = vsel %vm244, %v723, 0
        %v733 = vsel %vm244, %v724, 0
        %735 = vmatprep.subr.bf16.mxu0 %v720
        %736 = vmatpush1.bf16.msra.mxu0 %v719
        %737 = vmatprep.subr.bf16.mxu0 %v722
        %738 = vmatpush1.bf16.msra.mxu0 %v721
        %739 = vmatprep.subr.bf16.mxu0 %v733
        %740 = vmatpush1.bf16.msra.mxu0 %v730
        %741 = vmatprep.subr.bf16.mxu0 0
        %742 = vmatpush1.bf16.msra.mxu0 0
        %743 = vmatprep.subr.bf16.mxu0 0
        %744 = vmatpush1.bf16.msra.mxu0 0
        %745 = vmatprep.subr.bf16.mxu0 0
        %746 = vmatpush1.bf16.msra.mxu0 0
        %747 = vmatprep.subr.bf16.mxu0 0
        %748 = vmatpush1.bf16.msra.mxu0 0
        %749 = vmatprep.subr.bf16.mxu0 0
        %750 = vmatpush1.bf16.msra.mxu0 0
        %751 = vmatprep.subr.bf16.mxu0 0
        %752 = vmatpush1.bf16.msra.mxu0 0
        %753 = vmatprep.subr.bf16.mxu0 0
        %754 = vmatpush1.bf16.msra.mxu0 0
        %755 = vmatprep.subr.bf16.mxu0 0
        %756 = vmatpush1.bf16.msra.mxu0 0
        %757 = vmatprep.subr.bf16.mxu0 0
        %758 = vmatpush1.bf16.msra.mxu0 0
        %759 = vmatprep.subr.bf16.mxu0 0
        %760 = vmatpush1.bf16.msra.mxu0 0
        %761 = vmatprep.subr.bf16.mxu0 0
        %762 = vmatpush1.bf16.msra.mxu0 0
        %763 = vmatprep.subr.bf16.mxu0 0
        %764 = vmatpush1.bf16.msra.mxu0 0
        %765 = vmatprep.subr.bf16.mxu0 0
        %766 = vmatpush1.bf16.msra.mxu0 0
        %767 = vmatprep.mubr.bf16.mxu0 0
        %768 = vmatmul.mubr.bf16.gmra.mrb[0].mxu0 %v401
        %v769 = vpop.f32.mrb[0].mxu0
        %v770 = vadd.f32 0.0, %v769
        %v771 = vpop.f32.mrb[0].mxu0
        %v772 = vadd.f32 0.0, %v771
        %v773 = vpop.f32.mrb[0].mxu0
        %v774 = vpop.f32.mrb[0].mxu0
        %775 = vdwg.mxu0
        %v776 = vadd.f32 %v692, %v770
        %v777 = vadd.f32 %v694, %v772
        %v778 = vmax.f32 %v614, %v776
        %v779 = vmax.f32 %v615, %v777
        %780 = vmatprep.subr.bf16.mxu0 %v720
        %781 = vmatpush1.bf16.msra.mxu0 %v719
        %782 = vmatprep.subr.bf16.mxu0 %v722
        %783 = vmatpush1.bf16.msra.mxu0 %v721
        %784 = vmatprep.subr.bf16.mxu0 %v733
        %785 = vmatpush1.bf16.msra.mxu0 %v730
        %786 = vmatprep.subr.bf16.mxu0 0
        %787 = vmatpush1.bf16.msra.mxu0 0
        %788 = vmatprep.subr.bf16.mxu0 0
        %789 = vmatpush1.bf16.msra.mxu0 0
        %790 = vmatprep.subr.bf16.mxu0 0
        %791 = vmatpush1.bf16.msra.mxu0 0
        %792 = vmatprep.subr.bf16.mxu0 0
        %793 = vmatpush1.bf16.msra.mxu0 0
        %794 = vmatprep.subr.bf16.mxu0 0
        %795 = vmatpush1.bf16.msra.mxu0 0
        %796 = vmatprep.subr.bf16.mxu0 0
        %797 = vmatpush1.bf16.msra.mxu0 0
        %798 = vmatprep.subr.bf16.mxu0 0
        %799 = vmatpush1.bf16.msra.mxu0 0
        %800 = vmatprep.subr.bf16.mxu0 0
        %801 = vmatpush1.bf16.msra.mxu0 0
        %802 = vmatprep.subr.bf16.mxu0 0
        %803 = vmatpush1.bf16.msra.mxu0 0
        %804 = vmatprep.subr.bf16.mxu0 0
        %805 = vmatpush1.bf16.msra.mxu0 0
        %806 = vmatprep.subr.bf16.mxu0 0
        %807 = vmatpush1.bf16.msra.mxu0 0
        %808 = vmatprep.subr.bf16.mxu0 0
        %809 = vmatpush1.bf16.msra.mxu0 0
        %810 = vmatprep.subr.bf16.mxu0 0
        %811 = vmatpush1.bf16.msra.mxu0 0
        %812 = vmatprep.mubr.bf16.mxu0 0
        %813 = vmatmul.mubr.bf16.gmra.mrb[0].mxu0 %v242
        %v814 = vpop.f32.mrb[0].mxu0
        %v815 = vadd.f32 0.0, %v814
        %v816 = vpop.f32.mrb[0].mxu0
        %v817 = vadd.f32 0.0, %v816
        %v818 = vpop.f32.mrb[0].mxu0
        %v819 = vpop.f32.mrb[0].mxu0
        %820 = vdwg.mxu0
        %821 = vmatprep.subr.bf16.mxu0 %v556
        %822 = vmatpush1.bf16.msra.mxu0 %v555
        %823 = vmatprep.subr.bf16.mxu0 %v558
        %824 = vmatpush1.bf16.msra.mxu0 %v557
        %825 = vmatprep.subr.bf16.mxu0 %v569
        %826 = vmatpush1.bf16.msra.mxu0 %v566
        %827 = vmatprep.subr.bf16.mxu0 0
        %828 = vmatpush1.bf16.msra.mxu0 0
        %829 = vmatprep.subr.bf16.mxu0 0
        %830 = vmatpush1.bf16.msra.mxu0 0
        %831 = vmatprep.subr.bf16.mxu0 0
        %832 = vmatpush1.bf16.msra.mxu0 0
        %833 = vmatprep.subr.bf16.mxu0 0
        %834 = vmatpush1.bf16.msra.mxu0 0
        %835 = vmatprep.subr.bf16.mxu0 0
        %836 = vmatpush1.bf16.msra.mxu0 0
        %837 = vmatprep.subr.bf16.mxu0 0
        %838 = vmatpush1.bf16.msra.mxu0 0
        %839 = vmatprep.subr.bf16.mxu0 0
        %840 = vmatpush1.bf16.msra.mxu0 0
        %841 = vmatprep.subr.bf16.mxu0 0
        %842 = vmatpush1.bf16.msra.mxu0 0
        %843 = vmatprep.subr.bf16.mxu0 0
        %844 = vmatpush1.bf16.msra.mxu0 0
        %845 = vmatprep.subr.bf16.mxu0 0
        %846 = vmatpush1.bf16.msra.mxu0 0
        %847 = vmatprep.subr.bf16.mxu0 0
        %848 = vmatpush1.bf16.msra.mxu0 0
        %849 = vmatprep.subr.bf16.mxu0 0
        %850 = vmatpush1.bf16.msra.mxu0 0
        %851 = vmatprep.subr.bf16.mxu0 0
        %852 = vmatpush1.bf16.msra.mxu0 0
        %853 = vmatprep.mubr.bf16.mxu0 0
        %854 = vmatmul.mubr.bf16.gmra.mrb[0].mxu0 %v318
        %v855 = vpop.f32.mrb[0].mxu0
        %v856 = vadd.f32 %v815, %v855
        %v857 = vpop.f32.mrb[0].mxu0
        %v858 = vadd.f32 %v817, %v857
        %v859 = vpop.f32.mrb[0].mxu0
        %v860 = vpop.f32.mrb[0].mxu0
        %861 = vdwg.mxu0
        %s862 = scalar_lea.vmem %s197, 200
        %v863 = vld [vmem:[%s862] sm:$0xff]
        %v864 = vld [vmem:[%s862 + $0x8] sm:$0xff]
        %v865 = vld [vmem:[%s862 + $0x10] sm:$0xff]
        %v866 = vld [vmem:[%s862 + $0x18] sm:$0xff]
        %v867 = vld [vmem:[%s862 + $0x20] sm:$0x33]
        %v873 = vunpack.c.l.b16 %v863
        %v874 = vunpack.c.h.b16 %v863
        %v875 = vunpack.c.l.b16 %v864
        %v876 = vunpack.c.h.b16 %v864
        %v877 = vunpack.c.l.b16 %v865
        %v878 = vunpack.c.h.b16 %v865
        %v879 = vunpack.c.l.b16 %v866
        %v880 = vunpack.c.h.b16 %v866
        %v881 = vunpack.c.l.b16 %v867
        %v882 = vunpack.c.h.b16 %v867
        %v883 = vpack.c.b16 %v875, %v873
        %v884 = vpack.c.b16 %v876, %v874
        %v885 = vpack.c.b16 %v879, %v877
        %v886 = vpack.c.b16 %v880, %v878
        %v887 = vpack.c.b16 %v881, %v881
        %v888 = vpack.c.b16 %v882, %v882
        %v894 = vsel %vm244, %v887, 0
        %v897 = vsel %vm244, %v888, 0
        %899 = vmatprep.subr.bf16.mxu0 %v884
        %900 = vmatpush1.bf16.msra.mxu0 %v883
        %901 = vmatprep.subr.bf16.mxu0 %v886
        %902 = vmatpush1.bf16.msra.mxu0 %v885
        %903 = vmatprep.subr.bf16.mxu0 %v897
        %904 = vmatpush1.bf16.msra.mxu0 %v894
        %905 = vmatprep.subr.bf16.mxu0 0
        %906 = vmatpush1.bf16.msra.mxu0 0
        %907 = vmatprep.subr.bf16.mxu0 0
        %908 = vmatpush1.bf16.msra.mxu0 0
        %909 = vmatprep.subr.bf16.mxu0 0
        %910 = vmatpush1.bf16.msra.mxu0 0
        %911 = vmatprep.subr.bf16.mxu0 0
        %912 = vmatpush1.bf16.msra.mxu0 0
        %913 = vmatprep.subr.bf16.mxu0 0
        %914 = vmatpush1.bf16.msra.mxu0 0
        %915 = vmatprep.subr.bf16.mxu0 0
        %916 = vmatpush1.bf16.msra.mxu0 0
        %917 = vmatprep.subr.bf16.mxu0 0
        %918 = vmatpush1.bf16.msra.mxu0 0
        %919 = vmatprep.subr.bf16.mxu0 0
        %920 = vmatpush1.bf16.msra.mxu0 0
        %921 = vmatprep.subr.bf16.mxu0 0
        %922 = vmatpush1.bf16.msra.mxu0 0
        %923 = vmatprep.subr.bf16.mxu0 0
        %924 = vmatpush1.bf16.msra.mxu0 0
        %925 = vmatprep.subr.bf16.mxu0 0
        %926 = vmatpush1.bf16.msra.mxu0 0
        %927 = vmatprep.subr.bf16.mxu0 0
        %928 = vmatpush1.bf16.msra.mxu0 0
        %929 = vmatprep.subr.bf16.mxu0 0
        %930 = vmatpush1.bf16.msra.mxu0 0
        %931 = vmatprep.mubr.bf16.mxu0 0
        %932 = vmatmul.mubr.bf16.gmra.mrb[0].mxu0 %v401
        %v933 = vpop.f32.mrb[0].mxu0
        %v934 = vadd.f32 0.0, %v933
        %v935 = vpop.f32.mrb[0].mxu0
        %v936 = vadd.f32 0.0, %v935
        %v937 = vpop.f32.mrb[0].mxu0
        %v938 = vpop.f32.mrb[0].mxu0
        %939 = vdwg.mxu0
        %v940 = vadd.f32 %v856, %v934
        %v941 = vadd.f32 %v858, %v936
        %v942 = vmax.f32 %v778, %v940
        %v943 = vmax.f32 %v779, %v941
        %944 = vmatprep.subr.bf16.mxu0 %v884
        %945 = vmatpush1.bf16.msra.mxu0 %v883
        %946 = vmatprep.subr.bf16.mxu0 %v886
        %947 = vmatpush1.bf16.msra.mxu0 %v885
        %948 = vmatprep.subr.bf16.mxu0 %v897
        %949 = vmatpush1.bf16.msra.mxu0 %v894
        %950 = vmatprep.subr.bf16.mxu0 0
        %951 = vmatpush1.bf16.msra.mxu0 0
        %952 = vmatprep.subr.bf16.mxu0 0
        %953 = vmatpush1.bf16.msra.mxu0 0
        %954 = vmatprep.subr.bf16.mxu0 0
        %955 = vmatpush1.bf16.msra.mxu0 0
        %956 = vmatprep.subr.bf16.mxu0 0
        %957 = vmatpush1.bf16.msra.mxu0 0
        %958 = vmatprep.subr.bf16.mxu0 0
        %959 = vmatpush1.bf16.msra.mxu0 0
        %960 = vmatprep.subr.bf16.mxu0 0
        %961 = vmatpush1.bf16.msra.mxu0 0
        %962 = vmatprep.subr.bf16.mxu0 0
        %963 = vmatpush1.bf16.msra.mxu0 0
        %964 = vmatprep.subr.bf16.mxu0 0
        %965 = vmatpush1.bf16.msra.mxu0 0
        %966 = vmatprep.subr.bf16.mxu0 0
        %967 = vmatpush1.bf16.msra.mxu0 0
        %968 = vmatprep.subr.bf16.mxu0 0
        %969 = vmatpush1.bf16.msra.mxu0 0
        %970 = vmatprep.subr.bf16.mxu0 0
        %971 = vmatpush1.bf16.msra.mxu0 0
        %972 = vmatprep.subr.bf16.mxu0 0
        %973 = vmatpush1.bf16.msra.mxu0 0
        %974 = vmatprep.subr.bf16.mxu0 0
        %975 = vmatpush1.bf16.msra.mxu0 0
        %976 = vmatprep.mubr.bf16.mxu0 0
        %977 = vmatmul.mubr.bf16.gmra.mrb[0].mxu0 %v242
        %v978 = vpop.f32.mrb[0].mxu0
        %v979 = vadd.f32 0.0, %v978
        %v980 = vpop.f32.mrb[0].mxu0
        %v981 = vadd.f32 0.0, %v980
        %v982 = vpop.f32.mrb[0].mxu0
        %v983 = vpop.f32.mrb[0].mxu0
        %984 = vdwg.mxu0
        %985 = vmatprep.subr.bf16.mxu0 %v720
        %986 = vmatpush1.bf16.msra.mxu0 %v719
        %987 = vmatprep.subr.bf16.mxu0 %v722
        %988 = vmatpush1.bf16.msra.mxu0 %v721
        %989 = vmatprep.subr.bf16.mxu0 %v733
        %990 = vmatpush1.bf16.msra.mxu0 %v730
        %991 = vmatprep.subr.bf16.mxu0 0
        %992 = vmatpush1.bf16.msra.mxu0 0
        %993 = vmatprep.subr.bf16.mxu0 0
        %994 = vmatpush1.bf16.msra.mxu0 0
        %995 = vmatprep.subr.bf16.mxu0 0
        %996 = vmatpush1.bf16.msra.mxu0 0
        %997 = vmatprep.subr.bf16.mxu0 0
        %998 = vmatpush1.bf16.msra.mxu0 0
        %999 = vmatprep.subr.bf16.mxu0 0
        %1000 = vmatpush1.bf16.msra.mxu0 0
        %1001 = vmatprep.subr.bf16.mxu0 0
        %1002 = vmatpush1.bf16.msra.mxu0 0
        %1003 = vmatprep.subr.bf16.mxu0 0
        %1004 = vmatpush1.bf16.msra.mxu0 0
        %1005 = vmatprep.subr.bf16.mxu0 0
        %1006 = vmatpush1.bf16.msra.mxu0 0
        %1007 = vmatprep.subr.bf16.mxu0 0
        %1008 = vmatpush1.bf16.msra.mxu0 0
        %1009 = vmatprep.subr.bf16.mxu0 0
        %1010 = vmatpush1.bf16.msra.mxu0 0
        %1011 = vmatprep.subr.bf16.mxu0 0
        %1012 = vmatpush1.bf16.msra.mxu0 0
        %1013 = vmatprep.subr.bf16.mxu0 0
        %1014 = vmatpush1.bf16.msra.mxu0 0
        %1015 = vmatprep.subr.bf16.mxu0 0
        %1016 = vmatpush1.bf16.msra.mxu0 0
        %1017 = vmatprep.mubr.bf16.mxu0 0
        %1018 = vmatmul.mubr.bf16.gmra.mrb[0].mxu0 %v318
        %v1019 = vpop.f32.mrb[0].mxu0
        %v1020 = vadd.f32 %v979, %v1019
        %v1021 = vpop.f32.mrb[0].mxu0
        %v1022 = vadd.f32 %v981, %v1021
        %v1023 = vpop.f32.mrb[0].mxu0
        %v1024 = vpop.f32.mrb[0].mxu0
        %1025 = vdwg.mxu0
        %s1026 = scalar_lea.vmem %s197, 240
        %v1027 = vld [vmem:[%s1026] sm:$0xff]
        %v1028 = vld [vmem:[%s1026 + $0x8] sm:$0xff]
        %v1029 = vld [vmem:[%s1026 + $0x10] sm:$0xff]
        %v1030 = vld [vmem:[%s1026 + $0x18] sm:$0xff]
        %v1031 = vld [vmem:[%s1026 + $0x20] sm:$0x33]
        %v1037 = vunpack.c.l.b16 %v1027
        %v1038 = vunpack.c.h.b16 %v1027
        %v1039 = vunpack.c.l.b16 %v1028
        %v1040 = vunpack.c.h.b16 %v1028
        %v1041 = vunpack.c.l.b16 %v1029
        %v1042 = vunpack.c.h.b16 %v1029
        %v1043 = vunpack.c.l.b16 %v1030
        %v1044 = vunpack.c.h.b16 %v1030
        %v1045 = vunpack.c.l.b16 %v1031
        %v1046 = vunpack.c.h.b16 %v1031
        %v1047 = vpack.c.b16 %v1039, %v1037
        %v1048 = vpack.c.b16 %v1040, %v1038
        %v1049 = vpack.c.b16 %v1043, %v1041
        %v1050 = vpack.c.b16 %v1044, %v1042
        %v1051 = vpack.c.b16 %v1045, %v1045
        %v1052 = vpack.c.b16 %v1046, %v1046
        %v1058 = vsel %vm244, %v1051, 0
        %v1061 = vsel %vm244, %v1052, 0
        %1063 = vmatprep.subr.bf16.mxu0 %v1048
        %1064 = vmatpush1.bf16.msra.mxu0 %v1047
        %1065 = vmatprep.subr.bf16.mxu0 %v1050
        %1066 = vmatpush1.bf16.msra.mxu0 %v1049
        %1067 = vmatprep.subr.bf16.mxu0 %v1061
        %1068 = vmatpush1.bf16.msra.mxu0 %v1058
        %1069 = vmatprep.subr.bf16.mxu0 0
        %1070 = vmatpush1.bf16.msra.mxu0 0
        %1071 = vmatprep.subr.bf16.mxu0 0
        %1072 = vmatpush1.bf16.msra.mxu0 0
        %1073 = vmatprep.subr.bf16.mxu0 0
        %1074 = vmatpush1.bf16.msra.mxu0 0
        %1075 = vmatprep.subr.bf16.mxu0 0
        %1076 = vmatpush1.bf16.msra.mxu0 0
        %1077 = vmatprep.subr.bf16.mxu0 0
        %1078 = vmatpush1.bf16.msra.mxu0 0
        %1079 = vmatprep.subr.bf16.mxu0 0
        %1080 = vmatpush1.bf16.msra.mxu0 0
        %1081 = vmatprep.subr.bf16.mxu0 0
        %1082 = vmatpush1.bf16.msra.mxu0 0
        %1083 = vmatprep.subr.bf16.mxu0 0
        %1084 = vmatpush1.bf16.msra.mxu0 0
        %1085 = vmatprep.subr.bf16.mxu0 0
        %1086 = vmatpush1.bf16.msra.mxu0 0
        %1087 = vmatprep.subr.bf16.mxu0 0
        %1088 = vmatpush1.bf16.msra.mxu0 0
        %1089 = vmatprep.subr.bf16.mxu0 0
        %1090 = vmatpush1.bf16.msra.mxu0 0
        %1091 = vmatprep.subr.bf16.mxu0 0
        %1092 = vmatpush1.bf16.msra.mxu0 0
        %1093 = vmatprep.subr.bf16.mxu0 0
        %1094 = vmatpush1.bf16.msra.mxu0 0
        %1095 = vmatprep.mubr.bf16.mxu0 0
        %1096 = vmatmul.mubr.bf16.gmra.mrb[0].mxu0 %v401
        %v1097 = vpop.f32.mrb[0].mxu0
        %v1098 = vadd.f32 0.0, %v1097
        %v1099 = vpop.f32.mrb[0].mxu0
        %v1100 = vadd.f32 0.0, %v1099
        %v1101 = vpop.f32.mrb[0].mxu0
        %v1102 = vpop.f32.mrb[0].mxu0
        %1103 = vdwg.mxu0
        %v1104 = vadd.f32 %v1020, %v1098
        %v1105 = vadd.f32 %v1022, %v1100
        %v1106 = vmax.f32 %v942, %v1104
        %v1107 = vmax.f32 %v943, %v1105
        %1108 = vmatprep.subr.bf16.mxu0 %v1048
        %1109 = vmatpush1.bf16.msra.mxu0 %v1047
        %1110 = vmatprep.subr.bf16.mxu0 %v1050
        %1111 = vmatpush1.bf16.msra.mxu0 %v1049
        %1112 = vmatprep.subr.bf16.mxu0 %v1061
        %1113 = vmatpush1.bf16.msra.mxu0 %v1058
        %1114 = vmatprep.subr.bf16.mxu0 0
        %1115 = vmatpush1.bf16.msra.mxu0 0
        %1116 = vmatprep.subr.bf16.mxu0 0
        %1117 = vmatpush1.bf16.msra.mxu0 0
        %1118 = vmatprep.subr.bf16.mxu0 0
        %1119 = vmatpush1.bf16.msra.mxu0 0
        %1120 = vmatprep.subr.bf16.mxu0 0
        %1121 = vmatpush1.bf16.msra.mxu0 0
        %1122 = vmatprep.subr.bf16.mxu0 0
        %1123 = vmatpush1.bf16.msra.mxu0 0
        %1124 = vmatprep.subr.bf16.mxu0 0
        %1125 = vmatpush1.bf16.msra.mxu0 0
        %1126 = vmatprep.subr.bf16.mxu0 0
        %1127 = vmatpush1.bf16.msra.mxu0 0
        %1128 = vmatprep.subr.bf16.mxu0 0
        %1129 = vmatpush1.bf16.msra.mxu0 0
        %1130 = vmatprep.subr.bf16.mxu0 0
        %1131 = vmatpush1.bf16.msra.mxu0 0
        %1132 = vmatprep.subr.bf16.mxu0 0
        %1133 = vmatpush1.bf16.msra.mxu0 0
        %1134 = vmatprep.subr.bf16.mxu0 0
        %1135 = vmatpush1.bf16.msra.mxu0 0
        %1136 = vmatprep.subr.bf16.mxu0 0
        %1137 = vmatpush1.bf16.msra.mxu0 0
        %1138 = vmatprep.subr.bf16.mxu0 0
        %1139 = vmatpush1.bf16.msra.mxu0 0
        %1140 = vmatprep.mubr.bf16.mxu0 0
        %1141 = vmatmul.mubr.bf16.gmra.mrb[0].mxu0 %v242
        %v1142 = vpop.f32.mrb[0].mxu0
        %v1143 = vadd.f32 0.0, %v1142
        %v1144 = vpop.f32.mrb[0].mxu0
        %v1145 = vadd.f32 0.0, %v1144
        %v1146 = vpop.f32.mrb[0].mxu0
        %v1147 = vpop.f32.mrb[0].mxu0
        %1148 = vdwg.mxu0
        %1149 = vmatprep.subr.bf16.mxu0 %v884
        %1150 = vmatpush1.bf16.msra.mxu0 %v883
        %1151 = vmatprep.subr.bf16.mxu0 %v886
        %1152 = vmatpush1.bf16.msra.mxu0 %v885
        %1153 = vmatprep.subr.bf16.mxu0 %v897
        %1154 = vmatpush1.bf16.msra.mxu0 %v894
        %1155 = vmatprep.subr.bf16.mxu0 0
        %1156 = vmatpush1.bf16.msra.mxu0 0
        %1157 = vmatprep.subr.bf16.mxu0 0
        %1158 = vmatpush1.bf16.msra.mxu0 0
        %1159 = vmatprep.subr.bf16.mxu0 0
        %1160 = vmatpush1.bf16.msra.mxu0 0
        %1161 = vmatprep.subr.bf16.mxu0 0
        %1162 = vmatpush1.bf16.msra.mxu0 0
        %1163 = vmatprep.subr.bf16.mxu0 0
        %1164 = vmatpush1.bf16.msra.mxu0 0
        %1165 = vmatprep.subr.bf16.mxu0 0
        %1166 = vmatpush1.bf16.msra.mxu0 0
        %1167 = vmatprep.subr.bf16.mxu0 0
        %1168 = vmatpush1.bf16.msra.mxu0 0
        %1169 = vmatprep.subr.bf16.mxu0 0
        %1170 = vmatpush1.bf16.msra.mxu0 0
        %1171 = vmatprep.subr.bf16.mxu0 0
        %1172 = vmatpush1.bf16.msra.mxu0 0
        %1173 = vmatprep.subr.bf16.mxu0 0
        %1174 = vmatpush1.bf16.msra.mxu0 0
        %1175 = vmatprep.subr.bf16.mxu0 0
        %1176 = vmatpush1.bf16.msra.mxu0 0
        %1177 = vmatprep.subr.bf16.mxu0 0
        %1178 = vmatpush1.bf16.msra.mxu0 0
        %1179 = vmatprep.subr.bf16.mxu0 0
        %1180 = vmatpush1.bf16.msra.mxu0 0
        %1181 = vmatprep.mubr.bf16.mxu0 0
        %1182 = vmatmul.mubr.bf16.gmra.mrb[0].mxu0 %v318
        %v1183 = vpop.f32.mrb[0].mxu0
        %v1184 = vadd.f32 %v1143, %v1183
        %v1185 = vpop.f32.mrb[0].mxu0
        %v1186 = vadd.f32 %v1145, %v1185
        %v1187 = vpop.f32.mrb[0].mxu0
        %v1188 = vpop.f32.mrb[0].mxu0
        %1189 = vdwg.mxu0
        %s1190 = scalar_lea.vmem %s197, 280
        %v1191 = vld [vmem:[%s1190] sm:$0xff]
        %v1192 = vld [vmem:[%s1190 + $0x8] sm:$0xff]
        %v1193 = vld [vmem:[%s1190 + $0x10] sm:$0xff]
        %v1194 = vld [vmem:[%s1190 + $0x18] sm:$0xff]
        %v1195 = vld [vmem:[%s1190 + $0x20] sm:$0x33]
        %v1201 = vunpack.c.l.b16 %v1191
        %v1202 = vunpack.c.h.b16 %v1191
        %v1203 = vunpack.c.l.b16 %v1192
        %v1204 = vunpack.c.h.b16 %v1192
        %v1205 = vunpack.c.l.b16 %v1193
        %v1206 = vunpack.c.h.b16 %v1193
        %v1207 = vunpack.c.l.b16 %v1194
        %v1208 = vunpack.c.h.b16 %v1194
        %v1209 = vunpack.c.l.b16 %v1195
        %v1210 = vunpack.c.h.b16 %v1195
        %v1211 = vpack.c.b16 %v1203, %v1201
        %v1212 = vpack.c.b16 %v1204, %v1202
        %v1213 = vpack.c.b16 %v1207, %v1205
        %v1214 = vpack.c.b16 %v1208, %v1206
        %v1215 = vpack.c.b16 %v1209, %v1209
        %v1216 = vpack.c.b16 %v1210, %v1210
        %v1222 = vsel %vm244, %v1215, 0
        %v1225 = vsel %vm244, %v1216, 0
        %1227 = vmatprep.subr.bf16.mxu0 %v1212
        %1228 = vmatpush1.bf16.msra.mxu0 %v1211
        %1229 = vmatprep.subr.bf16.mxu0 %v1214
        %1230 = vmatpush1.bf16.msra.mxu0 %v1213
        %1231 = vmatprep.subr.bf16.mxu0 %v1225
        %1232 = vmatpush1.bf16.msra.mxu0 %v1222
        %1233 = vmatprep.subr.bf16.mxu0 0
        %1234 = vmatpush1.bf16.msra.mxu0 0
        %1235 = vmatprep.subr.bf16.mxu0 0
        %1236 = vmatpush1.bf16.msra.mxu0 0
        %1237 = vmatprep.subr.bf16.mxu0 0
        %1238 = vmatpush1.bf16.msra.mxu0 0
        %1239 = vmatprep.subr.bf16.mxu0 0
        %1240 = vmatpush1.bf16.msra.mxu0 0
        %1241 = vmatprep.subr.bf16.mxu0 0
        %1242 = vmatpush1.bf16.msra.mxu0 0
        %1243 = vmatprep.subr.bf16.mxu0 0
        %1244 = vmatpush1.bf16.msra.mxu0 0
        %1245 = vmatprep.subr.bf16.mxu0 0
        %1246 = vmatpush1.bf16.msra.mxu0 0
        %1247 = vmatprep.subr.bf16.mxu0 0
        %1248 = vmatpush1.bf16.msra.mxu0 0
        %1249 = vmatprep.subr.bf16.mxu0 0
        %1250 = vmatpush1.bf16.msra.mxu0 0
        %1251 = vmatprep.subr.bf16.mxu0 0
        %1252 = vmatpush1.bf16.msra.mxu0 0
        %1253 = vmatprep.subr.bf16.mxu0 0
        %1254 = vmatpush1.bf16.msra.mxu0 0
        %1255 = vmatprep.subr.bf16.mxu0 0
        %1256 = vmatpush1.bf16.msra.mxu0 0
        %1257 = vmatprep.subr.bf16.mxu0 0
        %1258 = vmatpush1.bf16.msra.mxu0 0
        %1259 = vmatprep.mubr.bf16.mxu0 0
        %1260 = vmatmul.mubr.bf16.gmra.mrb[0].mxu0 %v401
        %v1261 = vpop.f32.mrb[0].mxu0
        %v1262 = vadd.f32 0.0, %v1261
        %v1263 = vpop.f32.mrb[0].mxu0
        %v1264 = vadd.f32 0.0, %v1263
        %v1265 = vpop.f32.mrb[0].mxu0
        %v1266 = vpop.f32.mrb[0].mxu0
        %1267 = vdwg.mxu0
        %v1268 = vadd.f32 %v1184, %v1262
        %v1269 = vadd.f32 %v1186, %v1264
        %v1270 = vmax.f32 %v1106, %v1268
        %v1271 = vmax.f32 %v1107, %v1269
        %1272 = vmatprep.subr.bf16.mxu0 %v1212
        %1273 = vmatpush1.bf16.msra.mxu0 %v1211
        %1274 = vmatprep.subr.bf16.mxu0 %v1214
        %1275 = vmatpush1.bf16.msra.mxu0 %v1213
        %1276 = vmatprep.subr.bf16.mxu0 %v1225
        %1277 = vmatpush1.bf16.msra.mxu0 %v1222
        %1278 = vmatprep.subr.bf16.mxu0 0
        %1279 = vmatpush1.bf16.msra.mxu0 0
        %1280 = vmatprep.subr.bf16.mxu0 0
        %1281 = vmatpush1.bf16.msra.mxu0 0
        %1282 = vmatprep.subr.bf16.mxu0 0
        %1283 = vmatpush1.bf16.msra.mxu0 0
        %1284 = vmatprep.subr.bf16.mxu0 0
        %1285 = vmatpush1.bf16.msra.mxu0 0
        %1286 = vmatprep.subr.bf16.mxu0 0
        %1287 = vmatpush1.bf16.msra.mxu0 0
        %1288 = vmatprep.subr.bf16.mxu0 0
        %1289 = vmatpush1.bf16.msra.mxu0 0
        %1290 = vmatprep.subr.bf16.mxu0 0
        %1291 = vmatpush1.bf16.msra.mxu0 0
        %1292 = vmatprep.subr.bf16.mxu0 0
        %1293 = vmatpush1.bf16.msra.mxu0 0
        %1294 = vmatprep.subr.bf16.mxu0 0
        %1295 = vmatpush1.bf16.msra.mxu0 0
        %1296 = vmatprep.subr.bf16.mxu0 0
        %1297 = vmatpush1.bf16.msra.mxu0 0
        %1298 = vmatprep.subr.bf16.mxu0 0
        %1299 = vmatpush1.bf16.msra.mxu0 0
        %1300 = vmatprep.subr.bf16.mxu0 0
        %1301 = vmatpush1.bf16.msra.mxu0 0
        %1302 = vmatprep.subr.bf16.mxu0 0
        %1303 = vmatpush1.bf16.msra.mxu0 0
        %1304 = vmatprep.mubr.bf16.mxu0 0
        %1305 = vmatmul.mubr.bf16.gmra.mrb[0].mxu0 %v242
        %v1306 = vpop.f32.mrb[0].mxu0
        %v1307 = vadd.f32 0.0, %v1306
        %v1308 = vpop.f32.mrb[0].mxu0
        %v1309 = vadd.f32 0.0, %v1308
        %v1310 = vpop.f32.mrb[0].mxu0
        %v1311 = vpop.f32.mrb[0].mxu0
        %1312 = vdwg.mxu0
        %1313 = vmatprep.subr.bf16.mxu0 %v1048
        %1314 = vmatpush1.bf16.msra.mxu0 %v1047
        %1315 = vmatprep.subr.bf16.mxu0 %v1050
        %1316 = vmatpush1.bf16.msra.mxu0 %v1049
        %1317 = vmatprep.subr.bf16.mxu0 %v1061
        %1318 = vmatpush1.bf16.msra.mxu0 %v1058
        %1319 = vmatprep.subr.bf16.mxu0 0
        %1320 = vmatpush1.bf16.msra.mxu0 0
        %1321 = vmatprep.subr.bf16.mxu0 0
        %1322 = vmatpush1.bf16.msra.mxu0 0
        %1323 = vmatprep.subr.bf16.mxu0 0
        %1324 = vmatpush1.bf16.msra.mxu0 0
        %1325 = vmatprep.subr.bf16.mxu0 0
        %1326 = vmatpush1.bf16.msra.mxu0 0
        %1327 = vmatprep.subr.bf16.mxu0 0
        %1328 = vmatpush1.bf16.msra.mxu0 0
        %1329 = vmatprep.subr.bf16.mxu0 0
        %1330 = vmatpush1.bf16.msra.mxu0 0
        %1331 = vmatprep.subr.bf16.mxu0 0
        %1332 = vmatpush1.bf16.msra.mxu0 0
        %1333 = vmatprep.subr.bf16.mxu0 0
        %1334 = vmatpush1.bf16.msra.mxu0 0
        %1335 = vmatprep.subr.bf16.mxu0 0
        %1336 = vmatpush1.bf16.msra.mxu0 0
        %1337 = vmatprep.subr.bf16.mxu0 0
        %1338 = vmatpush1.bf16.msra.mxu0 0
        %1339 = vmatprep.subr.bf16.mxu0 0
        %1340 = vmatpush1.bf16.msra.mxu0 0
        %1341 = vmatprep.subr.bf16.mxu0 0
        %1342 = vmatpush1.bf16.msra.mxu0 0
        %1343 = vmatprep.subr.bf16.mxu0 0
        %1344 = vmatpush1.bf16.msra.mxu0 0
        %1345 = vmatprep.mubr.bf16.mxu0 0
        %1346 = vmatmul.mubr.bf16.gmra.mrb[0].mxu0 %v318
        %v1347 = vpop.f32.mrb[0].mxu0
        %v1348 = vadd.f32 %v1307, %v1347
        %v1349 = vpop.f32.mrb[0].mxu0
        %v1350 = vadd.f32 %v1309, %v1349
        %v1351 = vpop.f32.mrb[0].mxu0
        %v1352 = vpop.f32.mrb[0].mxu0
        %1353 = vdwg.mxu0
        %s1354 = scalar_lea.vmem %s197, 320
        %v1355 = vld [vmem:[%s1354] sm:$0xff]
        %v1356 = vld [vmem:[%s1354 + $0x8] sm:$0xff]
        %v1357 = vld [vmem:[%s1354 + $0x10] sm:$0xff]
        %v1358 = vld [vmem:[%s1354 + $0x18] sm:$0xff]
        %v1359 = vld [vmem:[%s1354 + $0x20] sm:$0x33]
        %v1365 = vunpack.c.l.b16 %v1355
        %v1366 = vunpack.c.h.b16 %v1355
        %v1367 = vunpack.c.l.b16 %v1356
        %v1368 = vunpack.c.h.b16 %v1356
        %v1369 = vunpack.c.l.b16 %v1357
        %v1370 = vunpack.c.h.b16 %v1357
        %v1371 = vunpack.c.l.b16 %v1358
        %v1372 = vunpack.c.h.b16 %v1358
        %v1373 = vunpack.c.l.b16 %v1359
        %v1374 = vunpack.c.h.b16 %v1359
        %v1375 = vpack.c.b16 %v1367, %v1365
        %v1376 = vpack.c.b16 %v1368, %v1366
        %v1377 = vpack.c.b16 %v1371, %v1369
        %v1378 = vpack.c.b16 %v1372, %v1370
        %v1379 = vpack.c.b16 %v1373, %v1373
        %v1380 = vpack.c.b16 %v1374, %v1374
        %v1386 = vsel %vm244, %v1379, 0
        %v1389 = vsel %vm244, %v1380, 0
        %1391 = vmatprep.subr.bf16.mxu0 %v1376
        %1392 = vmatpush1.bf16.msra.mxu0 %v1375
        %1393 = vmatprep.subr.bf16.mxu0 %v1378
        %1394 = vmatpush1.bf16.msra.mxu0 %v1377
        %1395 = vmatprep.subr.bf16.mxu0 %v1389
        %1396 = vmatpush1.bf16.msra.mxu0 %v1386
        %1397 = vmatprep.subr.bf16.mxu0 0
        %1398 = vmatpush1.bf16.msra.mxu0 0
        %1399 = vmatprep.subr.bf16.mxu0 0
        %1400 = vmatpush1.bf16.msra.mxu0 0
        %1401 = vmatprep.subr.bf16.mxu0 0
        %1402 = vmatpush1.bf16.msra.mxu0 0
        %1403 = vmatprep.subr.bf16.mxu0 0
        %1404 = vmatpush1.bf16.msra.mxu0 0
        %1405 = vmatprep.subr.bf16.mxu0 0
        %1406 = vmatpush1.bf16.msra.mxu0 0
        %1407 = vmatprep.subr.bf16.mxu0 0
        %1408 = vmatpush1.bf16.msra.mxu0 0
        %1409 = vmatprep.subr.bf16.mxu0 0
        %1410 = vmatpush1.bf16.msra.mxu0 0
        %1411 = vmatprep.subr.bf16.mxu0 0
        %1412 = vmatpush1.bf16.msra.mxu0 0
        %1413 = vmatprep.subr.bf16.mxu0 0
        %1414 = vmatpush1.bf16.msra.mxu0 0
        %1415 = vmatprep.subr.bf16.mxu0 0
        %1416 = vmatpush1.bf16.msra.mxu0 0
        %1417 = vmatprep.subr.bf16.mxu0 0
        %1418 = vmatpush1.bf16.msra.mxu0 0
        %1419 = vmatprep.subr.bf16.mxu0 0
        %1420 = vmatpush1.bf16.msra.mxu0 0
        %1421 = vmatprep.subr.bf16.mxu0 0
        %1422 = vmatpush1.bf16.msra.mxu0 0
        %1423 = vmatprep.mubr.bf16.mxu0 0
        %1424 = vmatmul.mubr.bf16.gmra.mrb[0].mxu0 %v401
        %v1425 = vpop.f32.mrb[0].mxu0
        %v1426 = vadd.f32 0.0, %v1425
        %v1427 = vpop.f32.mrb[0].mxu0
        %v1428 = vadd.f32 0.0, %v1427
        %v1429 = vpop.f32.mrb[0].mxu0
        %v1430 = vpop.f32.mrb[0].mxu0
        %1431 = vdwg.mxu0
        %v1432 = vadd.f32 %v1348, %v1426
        %v1433 = vadd.f32 %v1350, %v1428
        %v1434 = vmax.f32 %v1270, %v1432
        %v1435 = vmax.f32 %v1271, %v1433
        %1436 = vmatprep.subr.bf16.mxu0 %v1376
        %1437 = vmatpush1.bf16.msra.mxu0 %v1375
        %1438 = vmatprep.subr.bf16.mxu0 %v1378
        %1439 = vmatpush1.bf16.msra.mxu0 %v1377
        %1440 = vmatprep.subr.bf16.mxu0 %v1389
        %1441 = vmatpush1.bf16.msra.mxu0 %v1386
        %1442 = vmatprep.subr.bf16.mxu0 0
        %1443 = vmatpush1.bf16.msra.mxu0 0
        %1444 = vmatprep.subr.bf16.mxu0 0
        %1445 = vmatpush1.bf16.msra.mxu0 0
        %1446 = vmatprep.subr.bf16.mxu0 0
        %1447 = vmatpush1.bf16.msra.mxu0 0
        %1448 = vmatprep.subr.bf16.mxu0 0
        %1449 = vmatpush1.bf16.msra.mxu0 0
        %1450 = vmatprep.subr.bf16.mxu0 0
        %1451 = vmatpush1.bf16.msra.mxu0 0
        %1452 = vmatprep.subr.bf16.mxu0 0
        %1453 = vmatpush1.bf16.msra.mxu0 0
        %1454 = vmatprep.subr.bf16.mxu0 0
        %1455 = vmatpush1.bf16.msra.mxu0 0
        %1456 = vmatprep.subr.bf16.mxu0 0
        %1457 = vmatpush1.bf16.msra.mxu0 0
        %1458 = vmatprep.subr.bf16.mxu0 0
        %1459 = vmatpush1.bf16.msra.mxu0 0
        %1460 = vmatprep.subr.bf16.mxu0 0
        %1461 = vmatpush1.bf16.msra.mxu0 0
        %1462 = vmatprep.subr.bf16.mxu0 0
        %1463 = vmatpush1.bf16.msra.mxu0 0
        %1464 = vmatprep.subr.bf16.mxu0 0
        %1465 = vmatpush1.bf16.msra.mxu0 0
        %1466 = vmatprep.subr.bf16.mxu0 0
        %1467 = vmatpush1.bf16.msra.mxu0 0
        %1468 = vmatprep.mubr.bf16.mxu0 0
        %1469 = vmatmul.mubr.bf16.gmra.mrb[0].mxu0 %v242
        %v1470 = vpop.f32.mrb[0].mxu0
        %v1471 = vadd.f32 0.0, %v1470
        %v1472 = vpop.f32.mrb[0].mxu0
        %v1473 = vadd.f32 0.0, %v1472
        %v1474 = vpop.f32.mrb[0].mxu0
        %v1475 = vpop.f32.mrb[0].mxu0
        %1476 = vdwg.mxu0
        %1477 = vmatprep.subr.bf16.mxu0 %v1212
        %1478 = vmatpush1.bf16.msra.mxu0 %v1211
        %1479 = vmatprep.subr.bf16.mxu0 %v1214
        %1480 = vmatpush1.bf16.msra.mxu0 %v1213
        %1481 = vmatprep.subr.bf16.mxu0 %v1225
        %1482 = vmatpush1.bf16.msra.mxu0 %v1222
        %1483 = vmatprep.subr.bf16.mxu0 0
        %1484 = vmatpush1.bf16.msra.mxu0 0
        %1485 = vmatprep.subr.bf16.mxu0 0
        %1486 = vmatpush1.bf16.msra.mxu0 0
        %1487 = vmatprep.subr.bf16.mxu0 0
        %1488 = vmatpush1.bf16.msra.mxu0 0
        %1489 = vmatprep.subr.bf16.mxu0 0
        %1490 = vmatpush1.bf16.msra.mxu0 0
        %1491 = vmatprep.subr.bf16.mxu0 0
        %1492 = vmatpush1.bf16.msra.mxu0 0
        %1493 = vmatprep.subr.bf16.mxu0 0
        %1494 = vmatpush1.bf16.msra.mxu0 0
        %1495 = vmatprep.subr.bf16.mxu0 0
        %1496 = vmatpush1.bf16.msra.mxu0 0
        %1497 = vmatprep.subr.bf16.mxu0 0
        %1498 = vmatpush1.bf16.msra.mxu0 0
        %1499 = vmatprep.subr.bf16.mxu0 0
        %1500 = vmatpush1.bf16.msra.mxu0 0
        %1501 = vmatprep.subr.bf16.mxu0 0
        %1502 = vmatpush1.bf16.msra.mxu0 0
        %1503 = vmatprep.subr.bf16.mxu0 0
        %1504 = vmatpush1.bf16.msra.mxu0 0
        %1505 = vmatprep.subr.bf16.mxu0 0
        %1506 = vmatpush1.bf16.msra.mxu0 0
        %1507 = vmatprep.subr.bf16.mxu0 0
        %1508 = vmatpush1.bf16.msra.mxu0 0
        %1509 = vmatprep.mubr.bf16.mxu0 0
        %1510 = vmatmul.mubr.bf16.gmra.mrb[0].mxu0 %v318
        %v1511 = vpop.f32.mrb[0].mxu0
        %v1512 = vadd.f32 %v1471, %v1511
        %v1513 = vpop.f32.mrb[0].mxu0
        %v1514 = vadd.f32 %v1473, %v1513
        %v1515 = vpop.f32.mrb[0].mxu0
        %v1516 = vpop.f32.mrb[0].mxu0
        %1517 = vdwg.mxu0
        %s1518 = scalar_lea.vmem %s197, 360
        %v1519 = vld [vmem:[%s1518] sm:$0xff]
        %v1520 = vld [vmem:[%s1518 + $0x8] sm:$0xff]
        %v1521 = vld [vmem:[%s1518 + $0x10] sm:$0xff]
        %v1522 = vld [vmem:[%s1518 + $0x18] sm:$0xff]
        %v1523 = vld [vmem:[%s1518 + $0x20] sm:$0x33]
        %v1529 = vunpack.c.l.b16 %v1519
        %v1530 = vunpack.c.h.b16 %v1519
        %v1531 = vunpack.c.l.b16 %v1520
        %v1532 = vunpack.c.h.b16 %v1520
        %v1533 = vunpack.c.l.b16 %v1521
        %v1534 = vunpack.c.h.b16 %v1521
        %v1535 = vunpack.c.l.b16 %v1522
        %v1536 = vunpack.c.h.b16 %v1522
        %v1537 = vunpack.c.l.b16 %v1523
        %v1538 = vunpack.c.h.b16 %v1523
        %v1539 = vpack.c.b16 %v1531, %v1529
        %v1540 = vpack.c.b16 %v1532, %v1530
        %v1541 = vpack.c.b16 %v1535, %v1533
        %v1542 = vpack.c.b16 %v1536, %v1534
        %v1543 = vpack.c.b16 %v1537, %v1537
        %v1544 = vpack.c.b16 %v1538, %v1538
        %v1550 = vsel %vm244, %v1543, 0
        %v1553 = vsel %vm244, %v1544, 0
        %1555 = vmatprep.subr.bf16.mxu0 %v1540
        %1556 = vmatpush1.bf16.msra.mxu0 %v1539
        %1557 = vmatprep.subr.bf16.mxu0 %v1542
        %1558 = vmatpush1.bf16.msra.mxu0 %v1541
        %1559 = vmatprep.subr.bf16.mxu0 %v1553
        %1560 = vmatpush1.bf16.msra.mxu0 %v1550
        %1561 = vmatprep.subr.bf16.mxu0 0
        %1562 = vmatpush1.bf16.msra.mxu0 0
        %1563 = vmatprep.subr.bf16.mxu0 0
        %1564 = vmatpush1.bf16.msra.mxu0 0
        %1565 = vmatprep.subr.bf16.mxu0 0
        %1566 = vmatpush1.bf16.msra.mxu0 0
        %1567 = vmatprep.subr.bf16.mxu0 0
        %1568 = vmatpush1.bf16.msra.mxu0 0
        %1569 = vmatprep.subr.bf16.mxu0 0
        %1570 = vmatpush1.bf16.msra.mxu0 0
        %1571 = vmatprep.subr.bf16.mxu0 0
        %1572 = vmatpush1.bf16.msra.mxu0 0
        %1573 = vmatprep.subr.bf16.mxu0 0
        %1574 = vmatpush1.bf16.msra.mxu0 0
        %1575 = vmatprep.subr.bf16.mxu0 0
        %1576 = vmatpush1.bf16.msra.mxu0 0
        %1577 = vmatprep.subr.bf16.mxu0 0
        %1578 = vmatpush1.bf16.msra.mxu0 0
        %1579 = vmatprep.subr.bf16.mxu0 0
        %1580 = vmatpush1.bf16.msra.mxu0 0
        %1581 = vmatprep.subr.bf16.mxu0 0
        %1582 = vmatpush1.bf16.msra.mxu0 0
        %1583 = vmatprep.subr.bf16.mxu0 0
        %1584 = vmatpush1.bf16.msra.mxu0 0
        %1585 = vmatprep.subr.bf16.mxu0 0
        %1586 = vmatpush1.bf16.msra.mxu0 0
        %1587 = vmatprep.mubr.bf16.mxu0 0
        %1588 = vmatmul.mubr.bf16.gmra.mrb[0].mxu0 %v401
        %v1589 = vpop.f32.mrb[0].mxu0
        %v1590 = vadd.f32 0.0, %v1589
        %v1591 = vpop.f32.mrb[0].mxu0
        %v1592 = vadd.f32 0.0, %v1591
        %v1593 = vpop.f32.mrb[0].mxu0
        %v1594 = vpop.f32.mrb[0].mxu0
        %1595 = vdwg.mxu0
        %v1596 = vadd.f32 %v1512, %v1590
        %v1597 = vadd.f32 %v1514, %v1592
        %v1598 = vmax.f32 %v1434, %v1596
        %v1599 = vmax.f32 %v1435, %v1597
        %v1600 = vld [vmem:[%s1] sm:$0xff]
        %1602 = vset.pattern.permute.xlu0 0
        %1603 = vperm.xlu0 %1602, %v1600
        %v1604 = vpop.permute.xlu0 %1603
        %v1606 = vadd.f32 %v1598, %v1604
        %v1607 = vadd.f32 %v1599, %v1604
        %1608 = vst [vmem:[%s188] sm:$0xff] %v1606
        %1609 = vst [vmem:[%s188 + $0x8] sm:$0xff] %v1607
        %s1610 = sand.u32 %s109, 1
        %s1611 = scalar_lea.sflag [#allocation3], %s1610
        %s1612 = sand.u32 %s109, 1
        %s1613 = smul.addr %s1612, 16
        %s1614 = scalar_lea.vmem [#allocation2], %s1613
        // Predicated region
        $region33: #{tpu_custom_call.1} parent=31 // pred_check
          %p1615 = pneg %p119
        $region34: #{tpu_custom_call.1} parent=31 // pred_check_branch
          %1617 = sbr.rel (%p1615) target = $region36
        $region35: #{tpu_custom_call.1} parent=31 // pred_region
          %s1618 = smul.u32 2, %s22
          %s1620 = ssub.s32 256, 256
          %1621 = vsyncadd %s1611, %s1620
          %s1622 = smul.addr %s21, 2
          %s1623 = sadd.s32 %s1618, %s1622
          %s1624 = smul.addr %s1623, 128
          %s1625 = scalar_lea.hbm %s3, %s1624
          %s1627 = sshll.u32 %s1614, 4
          %s1628 = int_to_ptr.vmem [resolvable:$true] %s1627
          %1630 = dma.vmem_to_hbm [thread:$0]  %s1628, 256, %s1625, %s1611
        $region36: #{tpu_custom_call.1} parent=31 // pred_fallthru
          _
      $region32: #{tpu_custom_call.1} parent=5 // pred_fallthru
        _
      %p1631 = scmp.le.s32.totalorder 2, %s12
      // Predicated region
      $region37: #{tpu_custom_call.1} parent=5 // pred_check
        %p1632 = pneg %p1631
      $region38: #{tpu_custom_call.1} parent=5 // pred_check_branch
        %1634 = sbr.rel (%p1632) target = $region40
      $region39: #{tpu_custom_call.1} parent=5 // pred_region
        %s1635 = ssub.s32 %s12, 2
        // Predicated region
        $region41: #{tpu_custom_call.1} parent=39 // pred_check
          %p1636 = pneg %p125
        $region42: #{tpu_custom_call.1} parent=39 // pred_check_branch
          %1638 = sbr.rel (%p1636) target = $region44
        $region43: #{tpu_custom_call.1} parent=39 // pred_region
          %s1639 = sand.u32 %s110, 1
          %s1640 = scalar_lea.sflag [#allocation3], %s1639
          %s1641 = sand.u32 %s110, 1
          %s1642 = smul.addr %s1641, 16
          %s1643 = scalar_lea.vmem [#allocation2], %s1642
          %1644 = dma.done %s1640, 256
        $region44: #{tpu_custom_call.1} parent=39 // pred_fallthru
          _
      $region40: #{tpu_custom_call.1} parent=5 // pred_fallthru
        _
    $region6: #{tpu_custom_call.1} parent=1 // loop_footer
      %s16 = sadd.s32 1, %s12
    $region7: #{tpu_custom_call.1} parent=1 // loop_footer_branch
      %11 = sbr.rel target = $region3
    $region8: #{tpu_custom_call.1} parent=1 // loop_exit
      _
    %1645 = vsyncpa [#allocation3], 1
    %s1646 = scalar_lea.sflag [#allocation3], 1
    %1647 = vsyncpa %s1646, 1

</llo_original>
